<compile_context>
chip_gen: v7x
topology: tpu7x:2x2x1
jax: 0.10.0
libtpu: 0.0.40
codegen_flags: <defaults>
</compile_context>

<pallas_src>
import functools
import math

import jax
import jax.numpy as jnp
from jax import lax
from jax.experimental import pallas as pl
from jax.experimental.pallas import tpu as pltpu

NEG_SLOPE = 0.05
# Effectively -inf for the max-pool implicit padding.  Safe because every 3x3
# window's center tap is interior (the sentinel never survives the max) for
# finite inputs; matches the reference's true -inf padding.
NEG_BIG = 3.0e38


def _round_up(v, m):
    return ((v + m - 1) // m) * m


def _lrelu(v):
    return jnp.where(v > 0, v, NEG_SLOPE * v)


def _pick_bt(n, max_bt=8):
    """Images per grid step: amortize per-step overhead, keep >=2 grid steps."""
    for bt in range(min(n, max_bt), 0, -1):
        if n % bt == 0 and n // bt >= 2:
            return bt
    return n


# -----------------------------------------------------------------------------
# Fused inception-block kernel (bt images / grid step, pixels on lanes)
# -----------------------------------------------------------------------------
def _make_kernel(cfg):
    H, W, bt = cfg["h"], cfg["w"], cfg["bt"]
    hw = H * W
    r2p, r3p = cfg["r2p"], cfg["r3p"]

    def kernel(x_ref, ws1_ref, bs1_ref, w2_ref, b2_ref, w3_ref, b3_ref,
               w4_ref, b4_ref, o_ref):
        # ---- per-tap interior masks built in-kernel (no mask input stream) ----
        pix = lax.broadcasted_iota(jnp.int32, (1, hw), 1)
        if W & (W - 1) == 0:
            col = jnp.bitwise_and(pix, W - 1)
        else:
            col = pix % W  # TODO(synk): non-power-of-2 W uses vector remainder
        masks = {}
        for dh in (-1, 0, 1):
            for dw in (-2, -1, 0, 1, 2):
                m = ((pix >= max(-dh, 0) * W) & (pix < min(H, H - dh) * W) &
                     (col >= max(-dw, 0)) & (col < min(W, W - dw)))
                masks[(dh, dw)] = m.astype(jnp.float32)

        def tap(arr, dh, dw):
            """arr shifted so lane p holds arr at pixel (h+dh, w+dw); 0 if OOB."""
            s = dh * W + dw
            t = arr if s == 0 else pltpu.roll(arr, shift=(-s) % hw, axis=1)
            if dh == 0 and dw == 0:
                return t
            return t * masks[(dh, dw)]

        for b in range(bt):
            x_img = x_ref[b]                               # (Cin, H*W)

            # Stage 1: branch1 + branch2-reduce + branch3-reduce as ONE 1x1 matmul.
            z = jnp.dot(ws1_ref[...], x_img, preferred_element_type=jnp.float32)
            z = _lrelu(z + bs1_ref[...])                   # (r2p + r3p + out1, H*W)
            r2 = z[0:r2p]                                  # 8-aligned sublane slices
            r3 = z[r2p:r2p + r3p]
            y1 = z[r2p + r3p:]

            # Branch 2: 3x3 conv, pad (1,1) — single K = 9*r2p MXU dot.
            taps2 = jnp.concatenate(
                [tap(r2, dh, dw) for dh in (-1, 0, 1) for dw in (-1, 0, 1)],
                axis=0)                                    # (9*r2p, H*W)
            y2 = _lrelu(jnp.dot(w2_ref[...], taps2,
                                preferred_element_type=jnp.float32) + b2_ref[...])

            # Branch 3: 3x5 conv, pad (1,2) — single K = 15*r3p MXU dot.
            taps3 = jnp.concatenate(
                [tap(r3, dh, dw) for dh in (-1, 0, 1)
                 for dw in (-2, -1, 0, 1, 2)],
                axis=0)                                    # (15*r3p, H*W)
            y3 = _lrelu(jnp.dot(w3_ref[...], taps3,
                                preferred_element_type=jnp.float32) + b3_ref[...])

            # Branch 4: 3x3 max pool (stride 1, pad 1, implicit -inf) + 1x1 conv.
            mx = x_img
            for dh in (-1, 0, 1):
                for dw in (-1, 0, 1):
                    if dh == 0 and dw == 0:
                        continue
                    s = dh * W + dw
                    t = pltpu.roll(x_img, shift=(-s) % hw, axis=1)
                    m = masks[(dh, dw)]
                    mx = jnp.maximum(mx, t * m + (m - 1.0) * NEG_BIG)
            y4 = _lrelu(jnp.dot(w4_ref[...], mx,
                                preferred_element_type=jnp.float32) + b4_ref[...])

            # One lane-dense store of the channel-concatenated slab (already NCHW).
            o_ref[b] = jnp.concatenate([y1, y2, y3, y4], axis=0).astype(o_ref.dtype)

    return kernel


# -----------------------------------------------------------------------------
# Wrapper: free NCHW<->(N,C,H*W) reshapes only + pallas_call
# -----------------------------------------------------------------------------
def inception_forward(x_nchw, weights, cfg):
    n, cin, h, w = x_nchw.shape
    hw = h * w
    ctot = cfg["ctot"]
    bt = _pick_bt(n)
    kcfg = dict(cfg, h=h, w=w, bt=bt)

    # NCHW -> (N, Cin, H*W): contiguous reshape, no transpose / pad HBM passes.
    x = x_nchw.reshape(n, cin, hw).astype(jnp.float32)

    wargs = (weights["w_s1"], weights["b_s1"], weights["w2b"], weights["b2b"],
             weights["w3b"], weights["b3b"], weights["w4"], weights["b4"])

    in_specs = ([pl.BlockSpec((bt, cin, hw), lambda i: (i, 0, 0))]
                + [pl.BlockSpec(a.shape, lambda i, nd=a.ndim: (0,) * nd)
                   for a in wargs])

    out = pl.pallas_call(
        _make_kernel(kcfg),
        out_shape=jax.ShapeDtypeStruct((n, ctot, hw), jnp.float32),
        grid=(n // bt,),
        in_specs=in_specs,
        out_specs=pl.BlockSpec((bt, ctot, hw), lambda i: (i, 0, 0)),
        compiler_params=pltpu.CompilerParams(
            dimension_semantics=("parallel",),  # megacore on v7x; no-op on v5e/v6e
        ),
    )(x, *wargs)

    # (N, C_total, H*W) -> NCHW: contiguous reshape, free.
    return out.reshape(n, ctot, h, w)


# -----------------------------------------------------------------------------
# Parameter init (PyTorch Conv2d-like uniform) and packing into kernel layout
# -----------------------------------------------------------------------------
def init_raw_params(key, in_ch, out_1x1, red_3x3, out_3x3, red_5x5, out_5x5,
                    out_pool):
    def conv_init(k, cout, cin, kh, kw):
        kw_, kb_ = jax.random.split(k)
        bound = 1.0 / math.sqrt(cin * kh * kw)
        wgt = jax.random.uniform(kw_, (cout, cin, kh, kw), jnp.float32, -bound, bound)
        b = jax.random.uniform(kb_, (cout,), jnp.float32, -bound, bound)
        return wgt, b

    ks = jax.random.split(key, 6)
    raw = {}
    raw["w1"], raw["b1"] = conv_init(ks[0], out_1x1, in_ch, 1, 1)
    raw["w2a"], raw["b2a"] = conv_init(ks[1], red_3x3, in_ch, 1, 1)
    raw["w2b"], raw["b2b"] = conv_init(ks[2], out_3x3, red_3x3, 3, 3)
    raw["w3a"], raw["b3a"] = conv_init(ks[3], red_5x5, in_ch, 1, 1)
    raw["w3b"], raw["b3b"] = conv_init(ks[4], out_5x5, red_5x5, 3, 5)
    raw["w4"], raw["b4"] = conv_init(ks[5], out_pool, in_ch, 1, 1)
    return raw


def pack_params(raw):
    out_1x1 = raw["w1"].shape[0]
    red_3x3 = raw["w2a"].shape[0]
    out_3x3 = raw["w2b"].shape[0]
    red_5x5 = raw["w3a"].shape[0]
    out_5x5 = raw["w3b"].shape[0]
    out_pool = raw["w4"].shape[0]

    r2p = _round_up(red_3x3, 8)   # pad reduce channels to the sublane width so
    r3p = _round_up(red_5x5, 8)   # in-kernel sublane slices stay 8-aligned

    def w1x1(w):                  # (cout, cin, 1, 1) -> (cout, cin)
        return w[:, :, 0, 0]

    def pad_rows(m, rows):
        return jnp.pad(m, ((0, rows - m.shape[0]), (0, 0)))

    def w_taps(w_oihw, cin_pad):  # (cout, cin, kh, kw) -> (cout, kh*kw*cin_pad)
        co, ci, kh, kw = w_oihw.shape
        wt = jnp.transpose(w_oihw, (0, 2, 3, 1))
        wt = jnp.pad(wt, ((0, 0), (0, 0), (0, 0), (0, cin_pad - ci)))
        return wt.reshape(co, kh * kw * cin_pad)

    weights = {
        # Fused 1x1 stack ordered [branch2-reduce | branch3-reduce | branch1] so
        # every in-kernel sublane slice starts at a multiple of 8.
        "w_s1": jnp.concatenate([pad_rows(w1x1(raw["w2a"]), r2p),
                                 pad_rows(w1x1(raw["w3a"]), r3p),
                                 w1x1(raw["w1"])], axis=0),
        "b_s1": jnp.concatenate([jnp.pad(raw["b2a"], (0, r2p - red_3x3)),
                                 jnp.pad(raw["b3a"], (0, r3p - red_5x5)),
                                 raw["b1"]]).reshape(-1, 1),
        "w2b": w_taps(raw["w2b"], r2p), "b2b": raw["b2b"].reshape(-1, 1),
        "w3b": w_taps(raw["w3b"], r3p), "b3b": raw["b3b"].reshape(-1, 1),
        "w4": w1x1(raw["w4"]), "b4": raw["b4"].reshape(-1, 1),
    }
    cfg = {"r2p": r2p, "r3p": r3p,
           "ctot": out_1x1 + out_3x3 + out_5x5 + out_pool}
    return weights, cfg


# -----------------------------------------------------------------------------
# Pure-JAX reference (mirrors the PyTorch module) for verification
# -----------------------------------------------------------------------------
def reference_forward(x_nchw, raw):
    x = jnp.transpose(x_nchw, (0, 2, 3, 1)).astype(jnp.float32)

    def conv(inp, w_oihw, b, pad):
        wgt = jnp.transpose(w_oihw, (2, 3, 1, 0))               # HWIO
        y = lax.conv_general_dilated(
            inp, wgt, (1, 1), list(pad),
            dimension_numbers=("NHWC", "HWIO", "NHWC"))
        return y + b.reshape(1, 1, 1, -1)

    y1 = _lrelu(conv(x, raw["w1"], raw["b1"], ((0, 0), (0, 0))))
    r2 = _lrelu(conv(x, raw["w2a"], raw["b2a"], ((0, 0), (0, 0))))
    y2 = _lrelu(conv(r2, raw["w2b"], raw["b2b"], ((1, 1), (1, 1))))
    r3 = _lrelu(conv(x, raw["w3a"], raw["b3a"], ((0, 0), (0, 0))))
    y3 = _lrelu(conv(r3, raw["w3b"], raw["b3b"], ((1, 1), (2, 2))))
    mp = lax.reduce_window(
        x, -jnp.inf, lax.max, (1, 3, 3, 1), (1, 1, 1, 1),
        ((0, 0), (1, 1), (1, 1), (0, 0)))
    y4 = _lrelu(conv(mp, raw["w4"], raw["b4"], ((0, 0), (0, 0))))
    out = jnp.concatenate([y1, y2, y3, y4], axis=-1)
    return jnp.transpose(out, (0, 3, 1, 2))


# -----------------------------------------------------------------------------
if __name__ == "__main__":
    N, CIN, H, W = 2, 4, 16, 16
    OUT_1X1, RED_3X3, OUT_3X3 = 8, 4, 8
    RED_5X5, OUT_5X5, OUT_POOL = 4, 8, 8

    key = jax.random.PRNGKey(0)
    k_x, k_p = jax.random.split(key)
    x = jax.random.normal(k_x, (N, CIN, H, W), jnp.float32)

    raw = init_raw_params(k_p, CIN, OUT_1X1, RED_3X3, OUT_3X3,
                          RED_5X5, OUT_5X5, OUT_POOL)
    weights, cfg = pack_params(raw)

    fwd = jax.jit(functools.partial(inception_forward, cfg=cfg))
    out = jax.block_until_ready(fwd(x, weights))

    ref = jax.block_until_ready(reference_forward(x, raw))

    assert out.shape == (N, OUT_1X1 + OUT_3X3 + OUT_5X5 + OUT_POOL, H, W), out.shape
    assert jnp.allclose(out, ref, atol=1e-4, rtol=1e-4), (
        float(jnp.max(jnp.abs(out - ref))))
    print("KERNEL_OK")
</pallas_src>

<mosaic_0001>
module attributes {stable_mosaic.version = 11 : i64} {
  func.func @kernel(%arg0: i32, %arg1: memref<1x4x256xf32, #tpu.memory_space<vmem>>, %arg2: memref<24x4xf32, #tpu.memory_space<vmem>>, %arg3: memref<24x1xf32, #tpu.memory_space<vmem>>, %arg4: memref<8x72xf32, #tpu.memory_space<vmem>>, %arg5: memref<8x1xf32, #tpu.memory_space<vmem>>, %arg6: memref<8x120xf32, #tpu.memory_space<vmem>>, %arg7: memref<8x1xf32, #tpu.memory_space<vmem>>, %arg8: memref<8x4xf32, #tpu.memory_space<vmem>>, %arg9: memref<8x1xf32, #tpu.memory_space<vmem>>, %arg10: memref<1x32x256xf32, #tpu.memory_space<vmem>>) attributes {dimension_semantics = [#tpu.dimension_semantics<parallel>], iteration_bounds = array<i64: 2>, scalar_prefetch = 0 : i64, scratch_operands = 0 : i64, tpu.core_type = #tpu.core_type<tc>, window_params = [{transform_indices = @transform_0, window_bounds = array<i64: 1, 4, 256>}, {pipeline_mode = #tpu.pipeline_mode<synchronous>, transform_indices = @transform_1, window_bounds = array<i64: 24, 4>}, {pipeline_mode = #tpu.pipeline_mode<synchronous>, transform_indices = @transform_2, window_bounds = array<i64: 24, 1>}, {pipeline_mode = #tpu.pipeline_mode<synchronous>, transform_indices = @transform_3, window_bounds = array<i64: 8, 72>}, {pipeline_mode = #tpu.pipeline_mode<synchronous>, transform_indices = @transform_4, window_bounds = array<i64: 8, 1>}, {pipeline_mode = #tpu.pipeline_mode<synchronous>, transform_indices = @transform_5, window_bounds = array<i64: 8, 120>}, {pipeline_mode = #tpu.pipeline_mode<synchronous>, transform_indices = @transform_6, window_bounds = array<i64: 8, 1>}, {pipeline_mode = #tpu.pipeline_mode<synchronous>, transform_indices = @transform_7, window_bounds = array<i64: 8, 4>}, {pipeline_mode = #tpu.pipeline_mode<synchronous>, transform_indices = @transform_8, window_bounds = array<i64: 8, 1>}, {transform_indices = @transform_9, window_bounds = array<i64: 1, 32, 256>}]} {
    %0 = tpu.iota {dimensions = array<i32: 1>} : vector<1x256xi32>
    %c15_i32 = arith.constant 15 : i32
    %1 = vector.broadcast %c15_i32 : i32 to vector<1x256xi32>
    %2 = arith.andi %0, %1 : vector<1x256xi32>
    %c16_i32 = arith.constant 16 : i32
    %3 = vector.broadcast %c16_i32 : i32 to vector<1x256xi32>
    %4 = arith.cmpi sge, %0, %3 : vector<1x256xi32>
    %c256_i32 = arith.constant 256 : i32
    %5 = vector.broadcast %c256_i32 : i32 to vector<1x256xi32>
    %6 = arith.cmpi slt, %0, %5 : vector<1x256xi32>
    %7 = arith.andi %4, %6 : vector<1x256xi1>
    %c2_i32 = arith.constant 2 : i32
    %8 = vector.broadcast %c2_i32 : i32 to vector<1x256xi32>
    %9 = arith.cmpi sge, %2, %8 : vector<1x256xi32>
    %10 = arith.andi %7, %9 : vector<1x256xi1>
    %c16_i32_0 = arith.constant 16 : i32
    %11 = vector.broadcast %c16_i32_0 : i32 to vector<1x256xi32>
    %12 = arith.cmpi slt, %2, %11 : vector<1x256xi32>
    %13 = arith.andi %10, %12 : vector<1x256xi1>
    %14 = arith.extui %13 : vector<1x256xi1> to vector<1x256xi32>
    %15 = arith.sitofp %14 : vector<1x256xi32> to vector<1x256xf32>
    %c16_i32_1 = arith.constant 16 : i32
    %16 = vector.broadcast %c16_i32_1 : i32 to vector<1x256xi32>
    %17 = arith.cmpi sge, %0, %16 : vector<1x256xi32>
    %c256_i32_2 = arith.constant 256 : i32
    %18 = vector.broadcast %c256_i32_2 : i32 to vector<1x256xi32>
    %19 = arith.cmpi slt, %0, %18 : vector<1x256xi32>
    %20 = arith.andi %17, %19 : vector<1x256xi1>
    %c1_i32 = arith.constant 1 : i32
    %21 = vector.broadcast %c1_i32 : i32 to vector<1x256xi32>
    %22 = arith.cmpi sge, %2, %21 : vector<1x256xi32>
    %23 = arith.andi %20, %22 : vector<1x256xi1>
    %c16_i32_3 = arith.constant 16 : i32
    %24 = vector.broadcast %c16_i32_3 : i32 to vector<1x256xi32>
    %25 = arith.cmpi slt, %2, %24 : vector<1x256xi32>
    %26 = arith.andi %23, %25 : vector<1x256xi1>
    %27 = arith.extui %26 : vector<1x256xi1> to vector<1x256xi32>
    %28 = arith.sitofp %27 : vector<1x256xi32> to vector<1x256xf32>
    %c16_i32_4 = arith.constant 16 : i32
    %29 = vector.broadcast %c16_i32_4 : i32 to vector<1x256xi32>
    %30 = arith.cmpi sge, %0, %29 : vector<1x256xi32>
    %c256_i32_5 = arith.constant 256 : i32
    %31 = vector.broadcast %c256_i32_5 : i32 to vector<1x256xi32>
    %32 = arith.cmpi slt, %0, %31 : vector<1x256xi32>
    %33 = arith.andi %30, %32 : vector<1x256xi1>
    %c0_i32 = arith.constant 0 : i32
    %34 = vector.broadcast %c0_i32 : i32 to vector<1x256xi32>
    %35 = arith.cmpi sge, %2, %34 : vector<1x256xi32>
    %36 = arith.andi %33, %35 : vector<1x256xi1>
    %c16_i32_6 = arith.constant 16 : i32
    %37 = vector.broadcast %c16_i32_6 : i32 to vector<1x256xi32>
    %38 = arith.cmpi slt, %2, %37 : vector<1x256xi32>
    %39 = arith.andi %36, %38 : vector<1x256xi1>
    %40 = arith.extui %39 : vector<1x256xi1> to vector<1x256xi32>
    %41 = arith.sitofp %40 : vector<1x256xi32> to vector<1x256xf32>
    %c16_i32_7 = arith.constant 16 : i32
    %42 = vector.broadcast %c16_i32_7 : i32 to vector<1x256xi32>
    %43 = arith.cmpi sge, %0, %42 : vector<1x256xi32>
    %c256_i32_8 = arith.constant 256 : i32
    %44 = vector.broadcast %c256_i32_8 : i32 to vector<1x256xi32>
    %45 = arith.cmpi slt, %0, %44 : vector<1x256xi32>
    %46 = arith.andi %43, %45 : vector<1x256xi1>
    %c0_i32_9 = arith.constant 0 : i32
    %47 = vector.broadcast %c0_i32_9 : i32 to vector<1x256xi32>
    %48 = arith.cmpi sge, %2, %47 : vector<1x256xi32>
    %49 = arith.andi %46, %48 : vector<1x256xi1>
    %c15_i32_10 = arith.constant 15 : i32
    %50 = vector.broadcast %c15_i32_10 : i32 to vector<1x256xi32>
    %51 = arith.cmpi slt, %2, %50 : vector<1x256xi32>
    %52 = arith.andi %49, %51 : vector<1x256xi1>
    %53 = arith.extui %52 : vector<1x256xi1> to vector<1x256xi32>
    %54 = arith.sitofp %53 : vector<1x256xi32> to vector<1x256xf32>
    %c16_i32_11 = arith.constant 16 : i32
    %55 = vector.broadcast %c16_i32_11 : i32 to vector<1x256xi32>
    %56 = arith.cmpi sge, %0, %55 : vector<1x256xi32>
    %c256_i32_12 = arith.constant 256 : i32
    %57 = vector.broadcast %c256_i32_12 : i32 to vector<1x256xi32>
    %58 = arith.cmpi slt, %0, %57 : vector<1x256xi32>
    %59 = arith.andi %56, %58 : vector<1x256xi1>
    %c0_i32_13 = arith.constant 0 : i32
    %60 = vector.broadcast %c0_i32_13 : i32 to vector<1x256xi32>
    %61 = arith.cmpi sge, %2, %60 : vector<1x256xi32>
    %62 = arith.andi %59, %61 : vector<1x256xi1>
    %c14_i32 = arith.constant 14 : i32
    %63 = vector.broadcast %c14_i32 : i32 to vector<1x256xi32>
    %64 = arith.cmpi slt, %2, %63 : vector<1x256xi32>
    %65 = arith.andi %62, %64 : vector<1x256xi1>
    %66 = arith.extui %65 : vector<1x256xi1> to vector<1x256xi32>
    %67 = arith.sitofp %66 : vector<1x256xi32> to vector<1x256xf32>
    %c0_i32_14 = arith.constant 0 : i32
    %68 = vector.broadcast %c0_i32_14 : i32 to vector<1x256xi32>
    %69 = arith.cmpi sge, %0, %68 : vector<1x256xi32>
    %c256_i32_15 = arith.constant 256 : i32
    %70 = vector.broadcast %c256_i32_15 : i32 to vector<1x256xi32>
    %71 = arith.cmpi slt, %0, %70 : vector<1x256xi32>
    %72 = arith.andi %69, %71 : vector<1x256xi1>
    %c2_i32_16 = arith.constant 2 : i32
    %73 = vector.broadcast %c2_i32_16 : i32 to vector<1x256xi32>
    %74 = arith.cmpi sge, %2, %73 : vector<1x256xi32>
    %75 = arith.andi %72, %74 : vector<1x256xi1>
    %c16_i32_17 = arith.constant 16 : i32
    %76 = vector.broadcast %c16_i32_17 : i32 to vector<1x256xi32>
    %77 = arith.cmpi slt, %2, %76 : vector<1x256xi32>
    %78 = arith.andi %75, %77 : vector<1x256xi1>
    %79 = arith.extui %78 : vector<1x256xi1> to vector<1x256xi32>
    %80 = arith.sitofp %79 : vector<1x256xi32> to vector<1x256xf32>
    %c0_i32_18 = arith.constant 0 : i32
    %81 = vector.broadcast %c0_i32_18 : i32 to vector<1x256xi32>
    %82 = arith.cmpi sge, %0, %81 : vector<1x256xi32>
    %c256_i32_19 = arith.constant 256 : i32
    %83 = vector.broadcast %c256_i32_19 : i32 to vector<1x256xi32>
    %84 = arith.cmpi slt, %0, %83 : vector<1x256xi32>
    %85 = arith.andi %82, %84 : vector<1x256xi1>
    %c1_i32_20 = arith.constant 1 : i32
    %86 = vector.broadcast %c1_i32_20 : i32 to vector<1x256xi32>
    %87 = arith.cmpi sge, %2, %86 : vector<1x256xi32>
    %88 = arith.andi %85, %87 : vector<1x256xi1>
    %c16_i32_21 = arith.constant 16 : i32
    %89 = vector.broadcast %c16_i32_21 : i32 to vector<1x256xi32>
    %90 = arith.cmpi slt, %2, %89 : vector<1x256xi32>
    %91 = arith.andi %88, %90 : vector<1x256xi1>
    %92 = arith.extui %91 : vector<1x256xi1> to vector<1x256xi32>
    %93 = arith.sitofp %92 : vector<1x256xi32> to vector<1x256xf32>
    %c0_i32_22 = arith.constant 0 : i32
    %94 = vector.broadcast %c0_i32_22 : i32 to vector<1x256xi32>
    %95 = arith.cmpi sge, %0, %94 : vector<1x256xi32>
    %c256_i32_23 = arith.constant 256 : i32
    %96 = vector.broadcast %c256_i32_23 : i32 to vector<1x256xi32>
    %97 = arith.cmpi slt, %0, %96 : vector<1x256xi32>
    %98 = arith.andi %95, %97 : vector<1x256xi1>
    %c0_i32_24 = arith.constant 0 : i32
    %99 = vector.broadcast %c0_i32_24 : i32 to vector<1x256xi32>
    %100 = arith.cmpi sge, %2, %99 : vector<1x256xi32>
    %101 = arith.andi %98, %100 : vector<1x256xi1>
    %c15_i32_25 = arith.constant 15 : i32
    %102 = vector.broadcast %c15_i32_25 : i32 to vector<1x256xi32>
    %103 = arith.cmpi slt, %2, %102 : vector<1x256xi32>
    %104 = arith.andi %101, %103 : vector<1x256xi1>
    %105 = arith.extui %104 : vector<1x256xi1> to vector<1x256xi32>
    %106 = arith.sitofp %105 : vector<1x256xi32> to vector<1x256xf32>
    %c0_i32_26 = arith.constant 0 : i32
    %107 = vector.broadcast %c0_i32_26 : i32 to vector<1x256xi32>
    %108 = arith.cmpi sge, %0, %107 : vector<1x256xi32>
    %c256_i32_27 = arith.constant 256 : i32
    %109 = vector.broadcast %c256_i32_27 : i32 to vector<1x256xi32>
    %110 = arith.cmpi slt, %0, %109 : vector<1x256xi32>
    %111 = arith.andi %108, %110 : vector<1x256xi1>
    %c0_i32_28 = arith.constant 0 : i32
    %112 = vector.broadcast %c0_i32_28 : i32 to vector<1x256xi32>
    %113 = arith.cmpi sge, %2, %112 : vector<1x256xi32>
    %114 = arith.andi %111, %113 : vector<1x256xi1>
    %c14_i32_29 = arith.constant 14 : i32
    %115 = vector.broadcast %c14_i32_29 : i32 to vector<1x256xi32>
    %116 = arith.cmpi slt, %2, %115 : vector<1x256xi32>
    %117 = arith.andi %114, %116 : vector<1x256xi1>
    %118 = arith.extui %117 : vector<1x256xi1> to vector<1x256xi32>
    %119 = arith.sitofp %118 : vector<1x256xi32> to vector<1x256xf32>
    %c0_i32_30 = arith.constant 0 : i32
    %120 = vector.broadcast %c0_i32_30 : i32 to vector<1x256xi32>
    %121 = arith.cmpi sge, %0, %120 : vector<1x256xi32>
    %c240_i32 = arith.constant 240 : i32
    %122 = vector.broadcast %c240_i32 : i32 to vector<1x256xi32>
    %123 = arith.cmpi slt, %0, %122 : vector<1x256xi32>
    %124 = arith.andi %121, %123 : vector<1x256xi1>
    %c2_i32_31 = arith.constant 2 : i32
    %125 = vector.broadcast %c2_i32_31 : i32 to vector<1x256xi32>
    %126 = arith.cmpi sge, %2, %125 : vector<1x256xi32>
    %127 = arith.andi %124, %126 : vector<1x256xi1>
    %c16_i32_32 = arith.constant 16 : i32
    %128 = vector.broadcast %c16_i32_32 : i32 to vector<1x256xi32>
    %129 = arith.cmpi slt, %2, %128 : vector<1x256xi32>
    %130 = arith.andi %127, %129 : vector<1x256xi1>
    %131 = arith.extui %130 : vector<1x256xi1> to vector<1x256xi32>
    %132 = arith.sitofp %131 : vector<1x256xi32> to vector<1x256xf32>
    %c0_i32_33 = arith.constant 0 : i32
    %133 = vector.broadcast %c0_i32_33 : i32 to vector<1x256xi32>
    %134 = arith.cmpi sge, %0, %133 : vector<1x256xi32>
    %c240_i32_34 = arith.constant 240 : i32
    %135 = vector.broadcast %c240_i32_34 : i32 to vector<1x256xi32>
    %136 = arith.cmpi slt, %0, %135 : vector<1x256xi32>
    %137 = arith.andi %134, %136 : vector<1x256xi1>
    %c1_i32_35 = arith.constant 1 : i32
    %138 = vector.broadcast %c1_i32_35 : i32 to vector<1x256xi32>
    %139 = arith.cmpi sge, %2, %138 : vector<1x256xi32>
    %140 = arith.andi %137, %139 : vector<1x256xi1>
    %c16_i32_36 = arith.constant 16 : i32
    %141 = vector.broadcast %c16_i32_36 : i32 to vector<1x256xi32>
    %142 = arith.cmpi slt, %2, %141 : vector<1x256xi32>
    %143 = arith.andi %140, %142 : vector<1x256xi1>
    %144 = arith.extui %143 : vector<1x256xi1> to vector<1x256xi32>
    %145 = arith.sitofp %144 : vector<1x256xi32> to vector<1x256xf32>
    %c0_i32_37 = arith.constant 0 : i32
    %146 = vector.broadcast %c0_i32_37 : i32 to vector<1x256xi32>
    %147 = arith.cmpi sge, %0, %146 : vector<1x256xi32>
    %c240_i32_38 = arith.constant 240 : i32
    %148 = vector.broadcast %c240_i32_38 : i32 to vector<1x256xi32>
    %149 = arith.cmpi slt, %0, %148 : vector<1x256xi32>
    %150 = arith.andi %147, %149 : vector<1x256xi1>
    %c0_i32_39 = arith.constant 0 : i32
    %151 = vector.broadcast %c0_i32_39 : i32 to vector<1x256xi32>
    %152 = arith.cmpi sge, %2, %151 : vector<1x256xi32>
    %153 = arith.andi %150, %152 : vector<1x256xi1>
    %c16_i32_40 = arith.constant 16 : i32
    %154 = vector.broadcast %c16_i32_40 : i32 to vector<1x256xi32>
    %155 = arith.cmpi slt, %2, %154 : vector<1x256xi32>
    %156 = arith.andi %153, %155 : vector<1x256xi1>
    %157 = arith.extui %156 : vector<1x256xi1> to vector<1x256xi32>
    %158 = arith.sitofp %157 : vector<1x256xi32> to vector<1x256xf32>
    %c0_i32_41 = arith.constant 0 : i32
    %159 = vector.broadcast %c0_i32_41 : i32 to vector<1x256xi32>
    %160 = arith.cmpi sge, %0, %159 : vector<1x256xi32>
    %c240_i32_42 = arith.constant 240 : i32
    %161 = vector.broadcast %c240_i32_42 : i32 to vector<1x256xi32>
    %162 = arith.cmpi slt, %0, %161 : vector<1x256xi32>
    %163 = arith.andi %160, %162 : vector<1x256xi1>
    %c0_i32_43 = arith.constant 0 : i32
    %164 = vector.broadcast %c0_i32_43 : i32 to vector<1x256xi32>
    %165 = arith.cmpi sge, %2, %164 : vector<1x256xi32>
    %166 = arith.andi %163, %165 : vector<1x256xi1>
    %c15_i32_44 = arith.constant 15 : i32
    %167 = vector.broadcast %c15_i32_44 : i32 to vector<1x256xi32>
    %168 = arith.cmpi slt, %2, %167 : vector<1x256xi32>
    %169 = arith.andi %166, %168 : vector<1x256xi1>
    %170 = arith.extui %169 : vector<1x256xi1> to vector<1x256xi32>
    %171 = arith.sitofp %170 : vector<1x256xi32> to vector<1x256xf32>
    %c0_i32_45 = arith.constant 0 : i32
    %172 = vector.broadcast %c0_i32_45 : i32 to vector<1x256xi32>
    %173 = arith.cmpi sge, %0, %172 : vector<1x256xi32>
    %c240_i32_46 = arith.constant 240 : i32
    %174 = vector.broadcast %c240_i32_46 : i32 to vector<1x256xi32>
    %175 = arith.cmpi slt, %0, %174 : vector<1x256xi32>
    %176 = arith.andi %173, %175 : vector<1x256xi1>
    %c0_i32_47 = arith.constant 0 : i32
    %177 = vector.broadcast %c0_i32_47 : i32 to vector<1x256xi32>
    %178 = arith.cmpi sge, %2, %177 : vector<1x256xi32>
    %179 = arith.andi %176, %178 : vector<1x256xi1>
    %c14_i32_48 = arith.constant 14 : i32
    %180 = vector.broadcast %c14_i32_48 : i32 to vector<1x256xi32>
    %181 = arith.cmpi slt, %2, %180 : vector<1x256xi32>
    %182 = arith.andi %179, %181 : vector<1x256xi1>
    %183 = arith.extui %182 : vector<1x256xi1> to vector<1x256xi32>
    %184 = arith.sitofp %183 : vector<1x256xi32> to vector<1x256xf32>
    %c0 = arith.constant 0 : index
    %c0_49 = arith.constant 0 : index
    %c0_50 = arith.constant 0 : index
    %185 = vector.load %arg1[%c0, %c0_49, %c0_50] : memref<1x4x256xf32, #tpu.memory_space<vmem>>, vector<1x4x256xf32>
    %186 = vector.shape_cast %185 : vector<1x4x256xf32> to vector<4x256xf32>
    %c0_51 = arith.constant 0 : index
    %c0_52 = arith.constant 0 : index
    %187 = vector.load %arg2[%c0_51, %c0_52] : memref<24x4xf32, #tpu.memory_space<vmem>>, vector<24x4xf32>
    %cst = arith.constant dense<0.000000e+00> : vector<24x256xf32>
    %188 = tpu.matmul %187, %186, %cst {dimension_numbers = #tpu.dot_dimension_numbers<[1], [0], [0], [1], [0, 0, 1, 1], [], []>} : vector<24x4xf32>, vector<4x256xf32>, vector<24x256xf32> -> vector<24x256xf32>
    %c0_53 = arith.constant 0 : index
    %c0_54 = arith.constant 0 : index
    %189 = vector.load %arg3[%c0_53, %c0_54] : memref<24x1xf32, #tpu.memory_space<vmem>>, vector<24x1xf32>
    %190 = vector.broadcast %189 : vector<24x1xf32> to vector<24x256xf32>
    %191 = arith.addf %188, %190 : vector<24x256xf32>
    %cst_55 = arith.constant 0.000000e+00 : f32
    %192 = vector.broadcast %cst_55 : f32 to vector<24x256xf32>
    %193 = arith.cmpf ogt, %191, %192 : vector<24x256xf32>
    %cst_56 = arith.constant 5.000000e-02 : f32
    %194 = vector.broadcast %cst_56 : f32 to vector<24x256xf32>
    %195 = arith.mulf %194, %191 : vector<24x256xf32>
    %196 = arith.select %193, %191, %195 : vector<24x256xi1>, vector<24x256xf32>
    %197 = vector.extract_strided_slice %196 {offsets = [0, 0], sizes = [8, 256], strides = [1, 1]} : vector<24x256xf32> to vector<8x256xf32>
    %198 = vector.extract_strided_slice %196 {offsets = [8, 0], sizes = [8, 256], strides = [1, 1]} : vector<24x256xf32> to vector<8x256xf32>
    %199 = vector.extract_strided_slice %196 {offsets = [16, 0], sizes = [8, 256], strides = [1, 1]} : vector<24x256xf32> to vector<8x256xf32>
    %c17_i32 = arith.constant 17 : i32
    %200 = tpu.dynamic_rotate %197 by %c17_i32 dim 1 : vector<8x256xf32>, i32 -> vector<8x256xf32>
    %201 = vector.broadcast %28 : vector<1x256xf32> to vector<8x256xf32>
    %202 = arith.mulf %200, %201 : vector<8x256xf32>
    %c16_i32_57 = arith.constant 16 : i32
    %203 = tpu.dynamic_rotate %197 by %c16_i32_57 dim 1 : vector<8x256xf32>, i32 -> vector<8x256xf32>
    %204 = vector.broadcast %41 : vector<1x256xf32> to vector<8x256xf32>
    %205 = arith.mulf %203, %204 : vector<8x256xf32>
    %c15_i32_58 = arith.constant 15 : i32
    %206 = tpu.dynamic_rotate %197 by %c15_i32_58 dim 1 : vector<8x256xf32>, i32 -> vector<8x256xf32>
    %207 = vector.broadcast %54 : vector<1x256xf32> to vector<8x256xf32>
    %208 = arith.mulf %206, %207 : vector<8x256xf32>
    %c1_i32_59 = arith.constant 1 : i32
    %209 = tpu.dynamic_rotate %197 by %c1_i32_59 dim 1 : vector<8x256xf32>, i32 -> vector<8x256xf32>
    %210 = vector.broadcast %93 : vector<1x256xf32> to vector<8x256xf32>
    %211 = arith.mulf %209, %210 : vector<8x256xf32>
    %c255_i32 = arith.constant 255 : i32
    %212 = tpu.dynamic_rotate %197 by %c255_i32 dim 1 : vector<8x256xf32>, i32 -> vector<8x256xf32>
    %213 = vector.broadcast %106 : vector<1x256xf32> to vector<8x256xf32>
    %214 = arith.mulf %212, %213 : vector<8x256xf32>
    %c241_i32 = arith.constant 241 : i32
    %215 = tpu.dynamic_rotate %197 by %c241_i32 dim 1 : vector<8x256xf32>, i32 -> vector<8x256xf32>
    %216 = vector.broadcast %145 : vector<1x256xf32> to vector<8x256xf32>
    %217 = arith.mulf %215, %216 : vector<8x256xf32>
    %c240_i32_60 = arith.constant 240 : i32
    %218 = tpu.dynamic_rotate %197 by %c240_i32_60 dim 1 : vector<8x256xf32>, i32 -> vector<8x256xf32>
    %219 = vector.broadcast %158 : vector<1x256xf32> to vector<8x256xf32>
    %220 = arith.mulf %218, %219 : vector<8x256xf32>
    %c239_i32 = arith.constant 239 : i32
    %221 = tpu.dynamic_rotate %197 by %c239_i32 dim 1 : vector<8x256xf32>, i32 -> vector<8x256xf32>
    %222 = vector.broadcast %171 : vector<1x256xf32> to vector<8x256xf32>
    %223 = arith.mulf %221, %222 : vector<8x256xf32>
    %224 = tpu.concatenate %202, %205, %208, %211, %197, %214, %217, %220, %223 in 0 : vector<8x256xf32>, vector<8x256xf32>, vector<8x256xf32>, vector<8x256xf32>, vector<8x256xf32>, vector<8x256xf32>, vector<8x256xf32>, vector<8x256xf32>, vector<8x256xf32> -> vector<72x256xf32>
    %c0_61 = arith.constant 0 : index
    %c0_62 = arith.constant 0 : index
    %225 = vector.load %arg4[%c0_61, %c0_62] : memref<8x72xf32, #tpu.memory_space<vmem>>, vector<8x72xf32>
    %cst_63 = arith.constant dense<0.000000e+00> : vector<8x256xf32>
    %226 = tpu.matmul %225, %224, %cst_63 {dimension_numbers = #tpu.dot_dimension_numbers<[1], [0], [0], [1], [0, 0, 1, 1], [], []>} : vector<8x72xf32>, vector<72x256xf32>, vector<8x256xf32> -> vector<8x256xf32>
    %c0_64 = arith.constant 0 : index
    %c0_65 = arith.constant 0 : index
    %227 = vector.load %arg5[%c0_64, %c0_65] : memref<8x1xf32, #tpu.memory_space<vmem>>, vector<8x1xf32>
    %228 = vector.broadcast %227 : vector<8x1xf32> to vector<8x256xf32>
    %229 = arith.addf %226, %228 : vector<8x256xf32>
    %cst_66 = arith.constant 0.000000e+00 : f32
    %230 = vector.broadcast %cst_66 : f32 to vector<8x256xf32>
    %231 = arith.cmpf ogt, %229, %230 : vector<8x256xf32>
    %cst_67 = arith.constant 5.000000e-02 : f32
    %232 = vector.broadcast %cst_67 : f32 to vector<8x256xf32>
    %233 = arith.mulf %232, %229 : vector<8x256xf32>
    %234 = arith.select %231, %229, %233 : vector<8x256xi1>, vector<8x256xf32>
    %c18_i32 = arith.constant 18 : i32
    %235 = tpu.dynamic_rotate %198 by %c18_i32 dim 1 : vector<8x256xf32>, i32 -> vector<8x256xf32>
    %236 = vector.broadcast %15 : vector<1x256xf32> to vector<8x256xf32>
    %237 = arith.mulf %235, %236 : vector<8x256xf32>
    %c17_i32_68 = arith.constant 17 : i32
    %238 = tpu.dynamic_rotate %198 by %c17_i32_68 dim 1 : vector<8x256xf32>, i32 -> vector<8x256xf32>
    %239 = vector.broadcast %28 : vector<1x256xf32> to vector<8x256xf32>
    %240 = arith.mulf %238, %239 : vector<8x256xf32>
    %c16_i32_69 = arith.constant 16 : i32
    %241 = tpu.dynamic_rotate %198 by %c16_i32_69 dim 1 : vector<8x256xf32>, i32 -> vector<8x256xf32>
    %242 = vector.broadcast %41 : vector<1x256xf32> to vector<8x256xf32>
    %243 = arith.mulf %241, %242 : vector<8x256xf32>
    %c15_i32_70 = arith.constant 15 : i32
    %244 = tpu.dynamic_rotate %198 by %c15_i32_70 dim 1 : vector<8x256xf32>, i32 -> vector<8x256xf32>
    %245 = vector.broadcast %54 : vector<1x256xf32> to vector<8x256xf32>
    %246 = arith.mulf %244, %245 : vector<8x256xf32>
    %c14_i32_71 = arith.constant 14 : i32
    %247 = tpu.dynamic_rotate %198 by %c14_i32_71 dim 1 : vector<8x256xf32>, i32 -> vector<8x256xf32>
    %248 = vector.broadcast %67 : vector<1x256xf32> to vector<8x256xf32>
    %249 = arith.mulf %247, %248 : vector<8x256xf32>
    %c2_i32_72 = arith.constant 2 : i32
    %250 = tpu.dynamic_rotate %198 by %c2_i32_72 dim 1 : vector<8x256xf32>, i32 -> vector<8x256xf32>
    %251 = vector.broadcast %80 : vector<1x256xf32> to vector<8x256xf32>
    %252 = arith.mulf %250, %251 : vector<8x256xf32>
    %c1_i32_73 = arith.constant 1 : i32
    %253 = tpu.dynamic_rotate %198 by %c1_i32_73 dim 1 : vector<8x256xf32>, i32 -> vector<8x256xf32>
    %254 = vector.broadcast %93 : vector<1x256xf32> to vector<8x256xf32>
    %255 = arith.mulf %253, %254 : vector<8x256xf32>
    %c255_i32_74 = arith.constant 255 : i32
    %256 = tpu.dynamic_rotate %198 by %c255_i32_74 dim 1 : vector<8x256xf32>, i32 -> vector<8x256xf32>
    %257 = vector.broadcast %106 : vector<1x256xf32> to vector<8x256xf32>
    %258 = arith.mulf %256, %257 : vector<8x256xf32>
    %c254_i32 = arith.constant 254 : i32
    %259 = tpu.dynamic_rotate %198 by %c254_i32 dim 1 : vector<8x256xf32>, i32 -> vector<8x256xf32>
    %260 = vector.broadcast %119 : vector<1x256xf32> to vector<8x256xf32>
    %261 = arith.mulf %259, %260 : vector<8x256xf32>
    %c242_i32 = arith.constant 242 : i32
    %262 = tpu.dynamic_rotate %198 by %c242_i32 dim 1 : vector<8x256xf32>, i32 -> vector<8x256xf32>
    %263 = vector.broadcast %132 : vector<1x256xf32> to vector<8x256xf32>
    %264 = arith.mulf %262, %263 : vector<8x256xf32>
    %c241_i32_75 = arith.constant 241 : i32
    %265 = tpu.dynamic_rotate %198 by %c241_i32_75 dim 1 : vector<8x256xf32>, i32 -> vector<8x256xf32>
    %266 = vector.broadcast %145 : vector<1x256xf32> to vector<8x256xf32>
    %267 = arith.mulf %265, %266 : vector<8x256xf32>
    %c240_i32_76 = arith.constant 240 : i32
    %268 = tpu.dynamic_rotate %198 by %c240_i32_76 dim 1 : vector<8x256xf32>, i32 -> vector<8x256xf32>
    %269 = vector.broadcast %158 : vector<1x256xf32> to vector<8x256xf32>
    %270 = arith.mulf %268, %269 : vector<8x256xf32>
    %c239_i32_77 = arith.constant 239 : i32
    %271 = tpu.dynamic_rotate %198 by %c239_i32_77 dim 1 : vector<8x256xf32>, i32 -> vector<8x256xf32>
    %272 = vector.broadcast %171 : vector<1x256xf32> to vector<8x256xf32>
    %273 = arith.mulf %271, %272 : vector<8x256xf32>
    %c238_i32 = arith.constant 238 : i32
    %274 = tpu.dynamic_rotate %198 by %c238_i32 dim 1 : vector<8x256xf32>, i32 -> vector<8x256xf32>
    %275 = vector.broadcast %184 : vector<1x256xf32> to vector<8x256xf32>
    %276 = arith.mulf %274, %275 : vector<8x256xf32>
    %277 = tpu.concatenate %237, %240, %243, %246, %249, %252, %255, %198, %258, %261, %264, %267, %270, %273, %276 in 0 : vector<8x256xf32>, vector<8x256xf32>, vector<8x256xf32>, vector<8x256xf32>, vector<8x256xf32>, vector<8x256xf32>, vector<8x256xf32>, vector<8x256xf32>, vector<8x256xf32>, vector<8x256xf32>, vector<8x256xf32>, vector<8x256xf32>, vector<8x256xf32>, vector<8x256xf32>, vector<8x256xf32> -> vector<120x256xf32>
    %c0_78 = arith.constant 0 : index
    %c0_79 = arith.constant 0 : index
    %278 = vector.load %arg6[%c0_78, %c0_79] : memref<8x120xf32, #tpu.memory_space<vmem>>, vector<8x120xf32>
    %cst_80 = arith.constant dense<0.000000e+00> : vector<8x256xf32>
    %279 = tpu.matmul %278, %277, %cst_80 {dimension_numbers = #tpu.dot_dimension_numbers<[1], [0], [0], [1], [0, 0, 1, 1], [], []>} : vector<8x120xf32>, vector<120x256xf32>, vector<8x256xf32> -> vector<8x256xf32>
    %c0_81 = arith.constant 0 : index
    %c0_82 = arith.constant 0 : index
    %280 = vector.load %arg7[%c0_81, %c0_82] : memref<8x1xf32, #tpu.memory_space<vmem>>, vector<8x1xf32>
    %281 = vector.broadcast %280 : vector<8x1xf32> to vector<8x256xf32>
    %282 = arith.addf %279, %281 : vector<8x256xf32>
    %cst_83 = arith.constant 0.000000e+00 : f32
    %283 = vector.broadcast %cst_83 : f32 to vector<8x256xf32>
    %284 = arith.cmpf ogt, %282, %283 : vector<8x256xf32>
    %cst_84 = arith.constant 5.000000e-02 : f32
    %285 = vector.broadcast %cst_84 : f32 to vector<8x256xf32>
    %286 = arith.mulf %285, %282 : vector<8x256xf32>
    %287 = arith.select %284, %282, %286 : vector<8x256xi1>, vector<8x256xf32>
    %c17_i32_85 = arith.constant 17 : i32
    %288 = tpu.dynamic_rotate %186 by %c17_i32_85 dim 1 : vector<4x256xf32>, i32 -> vector<4x256xf32>
    %289 = vector.broadcast %28 : vector<1x256xf32> to vector<4x256xf32>
    %290 = arith.mulf %288, %289 : vector<4x256xf32>
    %cst_86 = arith.constant 1.000000e+00 : f32
    %291 = vector.broadcast %cst_86 : f32 to vector<1x256xf32>
    %292 = arith.subf %28, %291 : vector<1x256xf32>
    %cst_87 = arith.constant 3.000000e+38 : f32
    %293 = vector.broadcast %cst_87 : f32 to vector<1x256xf32>
    %294 = arith.mulf %292, %293 : vector<1x256xf32>
    %295 = vector.broadcast %294 : vector<1x256xf32> to vector<4x256xf32>
    %296 = arith.addf %290, %295 : vector<4x256xf32>
    %297 = arith.maximumf %186, %296 : vector<4x256xf32>
    %c16_i32_88 = arith.constant 16 : i32
    %298 = tpu.dynamic_rotate %186 by %c16_i32_88 dim 1 : vector<4x256xf32>, i32 -> vector<4x256xf32>
    %299 = vector.broadcast %41 : vector<1x256xf32> to vector<4x256xf32>
    %300 = arith.mulf %298, %299 : vector<4x256xf32>
    %cst_89 = arith.constant 1.000000e+00 : f32
    %301 = vector.broadcast %cst_89 : f32 to vector<1x256xf32>
    %302 = arith.subf %41, %301 : vector<1x256xf32>
    %cst_90 = arith.constant 3.000000e+38 : f32
    %303 = vector.broadcast %cst_90 : f32 to vector<1x256xf32>
    %304 = arith.mulf %302, %303 : vector<1x256xf32>
    %305 = vector.broadcast %304 : vector<1x256xf32> to vector<4x256xf32>
    %306 = arith.addf %300, %305 : vector<4x256xf32>
    %307 = arith.maximumf %297, %306 : vector<4x256xf32>
    %c15_i32_91 = arith.constant 15 : i32
    %308 = tpu.dynamic_rotate %186 by %c15_i32_91 dim 1 : vector<4x256xf32>, i32 -> vector<4x256xf32>
    %309 = vector.broadcast %54 : vector<1x256xf32> to vector<4x256xf32>
    %310 = arith.mulf %308, %309 : vector<4x256xf32>
    %cst_92 = arith.constant 1.000000e+00 : f32
    %311 = vector.broadcast %cst_92 : f32 to vector<1x256xf32>
    %312 = arith.subf %54, %311 : vector<1x256xf32>
    %cst_93 = arith.constant 3.000000e+38 : f32
    %313 = vector.broadcast %cst_93 : f32 to vector<1x256xf32>
    %314 = arith.mulf %312, %313 : vector<1x256xf32>
    %315 = vector.broadcast %314 : vector<1x256xf32> to vector<4x256xf32>
    %316 = arith.addf %310, %315 : vector<4x256xf32>
    %317 = arith.maximumf %307, %316 : vector<4x256xf32>
    %c1_i32_94 = arith.constant 1 : i32
    %318 = tpu.dynamic_rotate %186 by %c1_i32_94 dim 1 : vector<4x256xf32>, i32 -> vector<4x256xf32>
    %319 = vector.broadcast %93 : vector<1x256xf32> to vector<4x256xf32>
    %320 = arith.mulf %318, %319 : vector<4x256xf32>
    %cst_95 = arith.constant 1.000000e+00 : f32
    %321 = vector.broadcast %cst_95 : f32 to vector<1x256xf32>
    %322 = arith.subf %93, %321 : vector<1x256xf32>
    %cst_96 = arith.constant 3.000000e+38 : f32
    %323 = vector.broadcast %cst_96 : f32 to vector<1x256xf32>
    %324 = arith.mulf %322, %323 : vector<1x256xf32>
    %325 = vector.broadcast %324 : vector<1x256xf32> to vector<4x256xf32>
    %326 = arith.addf %320, %325 : vector<4x256xf32>
    %327 = arith.maximumf %317, %326 : vector<4x256xf32>
    %c255_i32_97 = arith.constant 255 : i32
    %328 = tpu.dynamic_rotate %186 by %c255_i32_97 dim 1 : vector<4x256xf32>, i32 -> vector<4x256xf32>
    %329 = vector.broadcast %106 : vector<1x256xf32> to vector<4x256xf32>
    %330 = arith.mulf %328, %329 : vector<4x256xf32>
    %cst_98 = arith.constant 1.000000e+00 : f32
    %331 = vector.broadcast %cst_98 : f32 to vector<1x256xf32>
    %332 = arith.subf %106, %331 : vector<1x256xf32>
    %cst_99 = arith.constant 3.000000e+38 : f32
    %333 = vector.broadcast %cst_99 : f32 to vector<1x256xf32>
    %334 = arith.mulf %332, %333 : vector<1x256xf32>
    %335 = vector.broadcast %334 : vector<1x256xf32> to vector<4x256xf32>
    %336 = arith.addf %330, %335 : vector<4x256xf32>
    %337 = arith.maximumf %327, %336 : vector<4x256xf32>
    %c241_i32_100 = arith.constant 241 : i32
    %338 = tpu.dynamic_rotate %186 by %c241_i32_100 dim 1 : vector<4x256xf32>, i32 -> vector<4x256xf32>
    %339 = vector.broadcast %145 : vector<1x256xf32> to vector<4x256xf32>
    %340 = arith.mulf %338, %339 : vector<4x256xf32>
    %cst_101 = arith.constant 1.000000e+00 : f32
    %341 = vector.broadcast %cst_101 : f32 to vector<1x256xf32>
    %342 = arith.subf %145, %341 : vector<1x256xf32>
    %cst_102 = arith.constant 3.000000e+38 : f32
    %343 = vector.broadcast %cst_102 : f32 to vector<1x256xf32>
    %344 = arith.mulf %342, %343 : vector<1x256xf32>
    %345 = vector.broadcast %344 : vector<1x256xf32> to vector<4x256xf32>
    %346 = arith.addf %340, %345 : vector<4x256xf32>
    %347 = arith.maximumf %337, %346 : vector<4x256xf32>
    %c240_i32_103 = arith.constant 240 : i32
    %348 = tpu.dynamic_rotate %186 by %c240_i32_103 dim 1 : vector<4x256xf32>, i32 -> vector<4x256xf32>
    %349 = vector.broadcast %158 : vector<1x256xf32> to vector<4x256xf32>
    %350 = arith.mulf %348, %349 : vector<4x256xf32>
    %cst_104 = arith.constant 1.000000e+00 : f32
    %351 = vector.broadcast %cst_104 : f32 to vector<1x256xf32>
    %352 = arith.subf %158, %351 : vector<1x256xf32>
    %cst_105 = arith.constant 3.000000e+38 : f32
    %353 = vector.broadcast %cst_105 : f32 to vector<1x256xf32>
    %354 = arith.mulf %352, %353 : vector<1x256xf32>
    %355 = vector.broadcast %354 : vector<1x256xf32> to vector<4x256xf32>
    %356 = arith.addf %350, %355 : vector<4x256xf32>
    %357 = arith.maximumf %347, %356 : vector<4x256xf32>
    %c239_i32_106 = arith.constant 239 : i32
    %358 = tpu.dynamic_rotate %186 by %c239_i32_106 dim 1 : vector<4x256xf32>, i32 -> vector<4x256xf32>
    %359 = vector.broadcast %171 : vector<1x256xf32> to vector<4x256xf32>
    %360 = arith.mulf %358, %359 : vector<4x256xf32>
    %cst_107 = arith.constant 1.000000e+00 : f32
    %361 = vector.broadcast %cst_107 : f32 to vector<1x256xf32>
    %362 = arith.subf %171, %361 : vector<1x256xf32>
    %cst_108 = arith.constant 3.000000e+38 : f32
    %363 = vector.broadcast %cst_108 : f32 to vector<1x256xf32>
    %364 = arith.mulf %362, %363 : vector<1x256xf32>
    %365 = vector.broadcast %364 : vector<1x256xf32> to vector<4x256xf32>
    %366 = arith.addf %360, %365 : vector<4x256xf32>
    %367 = arith.maximumf %357, %366 : vector<4x256xf32>
    %c0_109 = arith.constant 0 : index
    %c0_110 = arith.constant 0 : index
    %368 = vector.load %arg8[%c0_109, %c0_110] : memref<8x4xf32, #tpu.memory_space<vmem>>, vector<8x4xf32>
    %cst_111 = arith.constant dense<0.000000e+00> : vector<8x256xf32>
    %369 = tpu.matmul %368, %367, %cst_111 {dimension_numbers = #tpu.dot_dimension_numbers<[1], [0], [0], [1], [0, 0, 1, 1], [], []>} : vector<8x4xf32>, vector<4x256xf32>, vector<8x256xf32> -> vector<8x256xf32>
    %c0_112 = arith.constant 0 : index
    %c0_113 = arith.constant 0 : index
    %370 = vector.load %arg9[%c0_112, %c0_113] : memref<8x1xf32, #tpu.memory_space<vmem>>, vector<8x1xf32>
    %371 = vector.broadcast %370 : vector<8x1xf32> to vector<8x256xf32>
    %372 = arith.addf %369, %371 : vector<8x256xf32>
    %cst_114 = arith.constant 0.000000e+00 : f32
    %373 = vector.broadcast %cst_114 : f32 to vector<8x256xf32>
    %374 = arith.cmpf ogt, %372, %373 : vector<8x256xf32>
    %cst_115 = arith.constant 5.000000e-02 : f32
    %375 = vector.broadcast %cst_115 : f32 to vector<8x256xf32>
    %376 = arith.mulf %375, %372 : vector<8x256xf32>
    %377 = arith.select %374, %372, %376 : vector<8x256xi1>, vector<8x256xf32>
    %378 = tpu.concatenate %199, %234, %287, %377 in 0 : vector<8x256xf32>, vector<8x256xf32>, vector<8x256xf32>, vector<8x256xf32> -> vector<32x256xf32>
    %c0_116 = arith.constant 0 : index
    %c0_117 = arith.constant 0 : index
    %c0_118 = arith.constant 0 : index
    %379 = vector.load %arg10[%c0_116, %c0_117, %c0_118] : memref<1x32x256xf32, #tpu.memory_space<vmem>>, vector<1x32x256xf32>
    %380 = vector.shape_cast %379 : vector<1x32x256xf32> to vector<32x256xf32>
    %381 = vector.shape_cast %378 : vector<32x256xf32> to vector<1x32x256xf32>
    tpu.vector_store %arg10[%c0_116, %c0_117, %c0_118], %381 {strides = array<i32>} : memref<1x32x256xf32, #tpu.memory_space<vmem>>, vector<1x32x256xf32>,
    return
  }
  func.func @transform_0(%arg0: i32) -> (i32, i32, i32) {
    %c0_i32 = arith.constant 0 : i32
    %c0_i32_0 = arith.constant 0 : i32
    %c0_i32_1 = arith.constant 0 : i32
    return %arg0, %c0_i32, %c0_i32_0 : i32, i32, i32
  }
  func.func @transform_1(%arg0: i32) -> (i32, i32) {
    %c0_i32 = arith.constant 0 : i32
    %c0_i32_0 = arith.constant 0 : i32
    %c0_i32_1 = arith.constant 0 : i32
    return %c0_i32, %c0_i32_0 : i32, i32
  }
  func.func @transform_2(%arg0: i32) -> (i32, i32) {
    %c0_i32 = arith.constant 0 : i32
    %c0_i32_0 = arith.constant 0 : i32
    %c0_i32_1 = arith.constant 0 : i32
    return %c0_i32, %c0_i32_0 : i32, i32
  }
  func.func @transform_3(%arg0: i32) -> (i32, i32) {
    %c0_i32 = arith.constant 0 : i32
    %c0_i32_0 = arith.constant 0 : i32
    %c0_i32_1 = arith.constant 0 : i32
    return %c0_i32, %c0_i32_0 : i32, i32
  }
  func.func @transform_4(%arg0: i32) -> (i32, i32) {
    %c0_i32 = arith.constant 0 : i32
    %c0_i32_0 = arith.constant 0 : i32
    %c0_i32_1 = arith.constant 0 : i32
    return %c0_i32, %c0_i32_0 : i32, i32
  }
  func.func @transform_5(%arg0: i32) -> (i32, i32) {
    %c0_i32 = arith.constant 0 : i32
    %c0_i32_0 = arith.constant 0 : i32
    %c0_i32_1 = arith.constant 0 : i32
    return %c0_i32, %c0_i32_0 : i32, i32
  }
  func.func @transform_6(%arg0: i32) -> (i32, i32) {
    %c0_i32 = arith.constant 0 : i32
    %c0_i32_0 = arith.constant 0 : i32
    %c0_i32_1 = arith.constant 0 : i32
    return %c0_i32, %c0_i32_0 : i32, i32
  }
  func.func @transform_7(%arg0: i32) -> (i32, i32) {
    %c0_i32 = arith.constant 0 : i32
    %c0_i32_0 = arith.constant 0 : i32
    %c0_i32_1 = arith.constant 0 : i32
    return %c0_i32, %c0_i32_0 : i32, i32
  }
  func.func @transform_8(%arg0: i32) -> (i32, i32) {
    %c0_i32 = arith.constant 0 : i32
    %c0_i32_0 = arith.constant 0 : i32
    %c0_i32_1 = arith.constant 0 : i32
    return %c0_i32, %c0_i32_0 : i32, i32
  }
  func.func @transform_9(%arg0: i32) -> (i32, i32, i32) {
    %c0_i32 = arith.constant 0 : i32
    %c0_i32_0 = arith.constant 0 : i32
    %c0_i32_1 = arith.constant 0 : i32
    return %arg0, %c0_i32, %c0_i32_0 : i32, i32, i32
  }
}

</mosaic_0001>

<llo_original>
// kernel: inception_forward.1
$region0: #{inception_forward.1}
  #allocation0 [shape = 'u32[]', space=smem, size = 0x4, offset = 0x4, fixed_abs, tag = 'smem constant byte address 0x4 - core index']
  #allocation1 [shape = 'u32[144,128]{1,0:T(1,128)}', space=vmem, size = 0x12000, scoped, tag = 'internal scratch']
  %s0 = inlined_call_operand.vmem [shape: f32[2,4,256], index: 0, kind: input, shape index: {}]
  %s1 = inlined_call_operand.vmem [shape: f32[24,4], index: 1, kind: input, shape index: {}]
  %s2 = inlined_call_operand.vmem [shape: f32[24,1], index: 2, kind: input, shape index: {}]
  %s3 = inlined_call_operand.vmem [shape: f32[8,72], index: 3, kind: input, shape index: {}]
  %s4 = inlined_call_operand.vmem [shape: f32[8,1], index: 4, kind: input, shape index: {}]
  %s5 = inlined_call_operand.vmem [shape: f32[8,120], index: 5, kind: input, shape index: {}]
  %s6 = inlined_call_operand.vmem [shape: f32[8,1], index: 6, kind: input, shape index: {}]
  %s7 = inlined_call_operand.vmem [shape: f32[8,4], index: 7, kind: input, shape index: {}]
  %s8 = inlined_call_operand.vmem [shape: f32[8,1], index: 8, kind: input, shape index: {}]
  %s9 = inlined_call_operand.vmem [shape: f32[2,32,256], index: 9, kind: output, shape index: {}]
  %s10 = sld [smem:[#allocation0]]
  $region69: #{inception_forward.1} parent=0
    _
  %s12 = ssub.s32 1, %s10
  %s13 = scalar_select 0, %s12, %s10
  loop: start=0, step=1, limit=4
  $region2: #{inception_forward.1} parent=0 // loop_pre_header
    _
  $region3: #{inception_forward.1} parent=0 // loop_header
    %s15 = sphi 0, %s19
    %p16 = scmp.ge.s32.totalorder %s15, 4
    %s25 = sphi 0, %s27
    %s28 = sphi 0, %s25
    %s29 = sphi 0, %s28
    %s45 = sphi 0, %s29
    %s49 = sphi 0, %s49
    %s51 = sphi 0, %s49
    %s52 = sphi 0, %s51
    %s66 = sphi 0, %s52
    %s70 = sphi 0, %s70
    %s72 = sphi 0, %s70
    %s73 = sphi 0, %s72
    %s87 = sphi 0, %s73
    %s91 = sphi 0, %s91
    %s93 = sphi 0, %s91
    %s94 = sphi 0, %s93
    %s108 = sphi 0, %s94
    %s112 = sphi 0, %s112
    %s114 = sphi 0, %s112
    %s115 = sphi 0, %s114
    %s129 = sphi 0, %s115
    %s133 = sphi 0, %s133
    %s135 = sphi 0, %s133
    %s136 = sphi 0, %s135
    %s150 = sphi 0, %s136
    %s154 = sphi 0, %s154
    %s156 = sphi 0, %s154
    %s157 = sphi 0, %s156
    %s171 = sphi 0, %s157
    %s175 = sphi 0, %s175
    %s177 = sphi 0, %s175
    %s178 = sphi 0, %s177
    %s192 = sphi 0, %s178
    %s196 = sphi 0, %s196
    %s198 = sphi 0, %s196
    %s199 = sphi 0, %s198
    %s213 = sphi 0, %s199
    %s219 = sphi 0, %s221
    %s222 = sphi 0, %s219
    %s223 = sphi 0, %s222
    %s239 = sphi 0, %s223
  $region4: #{inception_forward.1} parent=0 // loop_header_branch
    %18 = sbr.rel (%p16) target = $region8
  $region5: #{inception_forward.1} parent=0 // loop_body
    %s20 = ssub.s32 %s15, 1
    %s21 = ssub.s32 %s15, 2
    %s22 = sadd.s32 %s15, 1
    %s23 = ssub.s32 %s15, %s22
    %p24 = scmp.eq.s32.totalorder %s23, 0
    %s26 = sadd.s32 %s25, 1
    %s27 = scalar_select %p24, %s25, %s26
    %p30 = pneg %p24
    %p31 = scmp.eq.s32.totalorder %s15, 1
    %p32 = por %p30, %p31
    %p33 = scmp.ne.s32.totalorder %s25, %s28
    %p34 = scmp.eq.s32.totalorder %s15, 0
    %p35 = por %p33, %p34
    %p36 = scmp.ne.s32.totalorder %s25, %s28
    %p37 = scmp.eq.s32.totalorder %s20, 1
    %p38 = por %p36, %p37
    %p39 = scmp.ne.s32.totalorder %s28, %s29
    %p40 = scmp.eq.s32.totalorder %s20, 0
    %p41 = por %p39, %p40
    %p42 = scmp.ne.s32.totalorder %s28, %s29
    %p43 = scmp.eq.s32.totalorder %s21, 1
    %p44 = por %p42, %p43
    %p46 = scmp.ne.s32.totalorder %s29, %s45
    %p47 = scmp.eq.s32.totalorder %s21, 0
    %p48 = por %p46, %p47
    %s50 = sadd.s32 %s49, 1
    %p53 = scmp.eq.s32.totalorder %s15, 1
    %p54 = scmp.ne.s32.totalorder %s49, %s51
    %p55 = scmp.eq.s32.totalorder %s15, 0
    %p56 = por %p54, %p55
    %p57 = scmp.ne.s32.totalorder %s49, %s51
    %p58 = scmp.eq.s32.totalorder %s20, 1
    %p59 = por %p57, %p58
    %p60 = scmp.ne.s32.totalorder %s51, %s52
    %p61 = scmp.eq.s32.totalorder %s20, 0
    %p62 = por %p60, %p61
    %p63 = scmp.ne.s32.totalorder %s51, %s52
    %p64 = scmp.eq.s32.totalorder %s21, 1
    %p65 = por %p63, %p64
    %p67 = scmp.ne.s32.totalorder %s52, %s66
    %p68 = scmp.eq.s32.totalorder %s21, 0
    %p69 = por %p67, %p68
    %s71 = sadd.s32 %s70, 1
    %p74 = scmp.eq.s32.totalorder %s15, 1
    %p75 = scmp.ne.s32.totalorder %s70, %s72
    %p76 = scmp.eq.s32.totalorder %s15, 0
    %p77 = por %p75, %p76
    %p78 = scmp.ne.s32.totalorder %s70, %s72
    %p79 = scmp.eq.s32.totalorder %s20, 1
    %p80 = por %p78, %p79
    %p81 = scmp.ne.s32.totalorder %s72, %s73
    %p82 = scmp.eq.s32.totalorder %s20, 0
    %p83 = por %p81, %p82
    %p84 = scmp.ne.s32.totalorder %s72, %s73
    %p85 = scmp.eq.s32.totalorder %s21, 1
    %p86 = por %p84, %p85
    %p88 = scmp.ne.s32.totalorder %s73, %s87
    %p89 = scmp.eq.s32.totalorder %s21, 0
    %p90 = por %p88, %p89
    %s92 = sadd.s32 %s91, 1
    %p95 = scmp.eq.s32.totalorder %s15, 1
    %p96 = scmp.ne.s32.totalorder %s91, %s93
    %p97 = scmp.eq.s32.totalorder %s15, 0
    %p98 = por %p96, %p97
    %p99 = scmp.ne.s32.totalorder %s91, %s93
    %p100 = scmp.eq.s32.totalorder %s20, 1
    %p101 = por %p99, %p100
    %p102 = scmp.ne.s32.totalorder %s93, %s94
    %p103 = scmp.eq.s32.totalorder %s20, 0
    %p104 = por %p102, %p103
    %p105 = scmp.ne.s32.totalorder %s93, %s94
    %p106 = scmp.eq.s32.totalorder %s21, 1
    %p107 = por %p105, %p106
    %p109 = scmp.ne.s32.totalorder %s94, %s108
    %p110 = scmp.eq.s32.totalorder %s21, 0
    %p111 = por %p109, %p110
    %s113 = sadd.s32 %s112, 1
    %p116 = scmp.eq.s32.totalorder %s15, 1
    %p117 = scmp.ne.s32.totalorder %s112, %s114
    %p118 = scmp.eq.s32.totalorder %s15, 0
    %p119 = por %p117, %p118
    %p120 = scmp.ne.s32.totalorder %s112, %s114
    %p121 = scmp.eq.s32.totalorder %s20, 1
    %p122 = por %p120, %p121
    %p123 = scmp.ne.s32.totalorder %s114, %s115
    %p124 = scmp.eq.s32.totalorder %s20, 0
    %p125 = por %p123, %p124
    %p126 = scmp.ne.s32.totalorder %s114, %s115
    %p127 = scmp.eq.s32.totalorder %s21, 1
    %p128 = por %p126, %p127
    %p130 = scmp.ne.s32.totalorder %s115, %s129
    %p131 = scmp.eq.s32.totalorder %s21, 0
    %p132 = por %p130, %p131
    %s134 = sadd.s32 %s133, 1
    %p137 = scmp.eq.s32.totalorder %s15, 1
    %p138 = scmp.ne.s32.totalorder %s133, %s135
    %p139 = scmp.eq.s32.totalorder %s15, 0
    %p140 = por %p138, %p139
    %p141 = scmp.ne.s32.totalorder %s133, %s135
    %p142 = scmp.eq.s32.totalorder %s20, 1
    %p143 = por %p141, %p142
    %p144 = scmp.ne.s32.totalorder %s135, %s136
    %p145 = scmp.eq.s32.totalorder %s20, 0
    %p146 = por %p144, %p145
    %p147 = scmp.ne.s32.totalorder %s135, %s136
    %p148 = scmp.eq.s32.totalorder %s21, 1
    %p149 = por %p147, %p148
    %p151 = scmp.ne.s32.totalorder %s136, %s150
    %p152 = scmp.eq.s32.totalorder %s21, 0
    %p153 = por %p151, %p152
    %s155 = sadd.s32 %s154, 1
    %p158 = scmp.eq.s32.totalorder %s15, 1
    %p159 = scmp.ne.s32.totalorder %s154, %s156
    %p160 = scmp.eq.s32.totalorder %s15, 0
    %p161 = por %p159, %p160
    %p162 = scmp.ne.s32.totalorder %s154, %s156
    %p163 = scmp.eq.s32.totalorder %s20, 1
    %p164 = por %p162, %p163
    %p165 = scmp.ne.s32.totalorder %s156, %s157
    %p166 = scmp.eq.s32.totalorder %s20, 0
    %p167 = por %p165, %p166
    %p168 = scmp.ne.s32.totalorder %s156, %s157
    %p169 = scmp.eq.s32.totalorder %s21, 1
    %p170 = por %p168, %p169
    %p172 = scmp.ne.s32.totalorder %s157, %s171
    %p173 = scmp.eq.s32.totalorder %s21, 0
    %p174 = por %p172, %p173
    %s176 = sadd.s32 %s175, 1
    %p179 = scmp.eq.s32.totalorder %s15, 1
    %p180 = scmp.ne.s32.totalorder %s175, %s177
    %p181 = scmp.eq.s32.totalorder %s15, 0
    %p182 = por %p180, %p181
    %p183 = scmp.ne.s32.totalorder %s175, %s177
    %p184 = scmp.eq.s32.totalorder %s20, 1
    %p185 = por %p183, %p184
    %p186 = scmp.ne.s32.totalorder %s177, %s178
    %p187 = scmp.eq.s32.totalorder %s20, 0
    %p188 = por %p186, %p187
    %p189 = scmp.ne.s32.totalorder %s177, %s178
    %p190 = scmp.eq.s32.totalorder %s21, 1
    %p191 = por %p189, %p190
    %p193 = scmp.ne.s32.totalorder %s178, %s192
    %p194 = scmp.eq.s32.totalorder %s21, 0
    %p195 = por %p193, %p194
    %s197 = sadd.s32 %s196, 1
    %p200 = scmp.eq.s32.totalorder %s15, 1
    %p201 = scmp.ne.s32.totalorder %s196, %s198
    %p202 = scmp.eq.s32.totalorder %s15, 0
    %p203 = por %p201, %p202
    %p204 = scmp.ne.s32.totalorder %s196, %s198
    %p205 = scmp.eq.s32.totalorder %s20, 1
    %p206 = por %p204, %p205
    %p207 = scmp.ne.s32.totalorder %s198, %s199
    %p208 = scmp.eq.s32.totalorder %s20, 0
    %p209 = por %p207, %p208
    %p210 = scmp.ne.s32.totalorder %s198, %s199
    %p211 = scmp.eq.s32.totalorder %s21, 1
    %p212 = por %p210, %p211
    %p214 = scmp.ne.s32.totalorder %s199, %s213
    %p215 = scmp.eq.s32.totalorder %s21, 0
    %p216 = por %p214, %p215
    %s217 = ssub.s32 %s15, %s22
    %p218 = scmp.eq.s32.totalorder %s217, 0
    %s220 = sadd.s32 %s219, 1
    %s221 = scalar_select %p218, %s219, %s220
    %p224 = pneg %p218
    %p225 = scmp.eq.s32.totalorder %s15, 1
    %p226 = por %p224, %p225
    %p227 = scmp.ne.s32.totalorder %s219, %s222
    %p228 = scmp.eq.s32.totalorder %s15, 0
    %p229 = por %p227, %p228
    %p230 = scmp.ne.s32.totalorder %s219, %s222
    %p231 = scmp.eq.s32.totalorder %s20, 1
    %p232 = por %p230, %p231
    %p233 = scmp.ne.s32.totalorder %s222, %s223
    %p234 = scmp.eq.s32.totalorder %s20, 0
    %p235 = por %p233, %p234
    %p236 = scmp.ne.s32.totalorder %s222, %s223
    %p237 = scmp.eq.s32.totalorder %s21, 1
    %p238 = por %p236, %p237
    %p240 = scmp.ne.s32.totalorder %s223, %s239
    %p241 = scmp.eq.s32.totalorder %s21, 0
    %p242 = por %p240, %p241
    %p243 = scmp.le.s32.totalorder 1, %s15
    %p244 = scmp.lt.s32.totalorder %s15, 3
    %p245 = pnand %p243, %p244
    %p246 = pneg %p245
    // Predicated region
    $region9: #{inception_forward.1} parent=5 // pred_check
      _
    $region10: #{inception_forward.1} parent=5 // pred_check_branch
      %248 = sbr.rel (%p245) target = $region12
    $region11: #{inception_forward.1} parent=5 // pred_region
      %s249 = ssub.s32 %s15, 1
      // Predicated region
      $region13: #{inception_forward.1} parent=11 // pred_check
        %p250 = pneg %p62
      $region14: #{inception_forward.1} parent=11 // pred_check_branch
        %252 = sbr.rel (%p250) target = $region16
      $region15: #{inception_forward.1} parent=11 // pred_region
        _
      $region16: #{inception_forward.1} parent=11 // pred_fallthru
        _
      // Predicated region
      $region17: #{inception_forward.1} parent=11 // pred_check
        %p253 = pneg %p83
      $region18: #{inception_forward.1} parent=11 // pred_check_branch
        %255 = sbr.rel (%p253) target = $region20
      $region19: #{inception_forward.1} parent=11 // pred_region
        _
      $region20: #{inception_forward.1} parent=11 // pred_fallthru
        _
      // Predicated region
      $region21: #{inception_forward.1} parent=11 // pred_check
        %p256 = pneg %p104
      $region22: #{inception_forward.1} parent=11 // pred_check_branch
        %258 = sbr.rel (%p256) target = $region24
      $region23: #{inception_forward.1} parent=11 // pred_region
        _
      $region24: #{inception_forward.1} parent=11 // pred_fallthru
        _
      // Predicated region
      $region25: #{inception_forward.1} parent=11 // pred_check
        %p259 = pneg %p125
      $region26: #{inception_forward.1} parent=11 // pred_check_branch
        %261 = sbr.rel (%p259) target = $region28
      $region27: #{inception_forward.1} parent=11 // pred_region
        _
      $region28: #{inception_forward.1} parent=11 // pred_fallthru
        _
      // Predicated region
      $region29: #{inception_forward.1} parent=11 // pred_check
        %p262 = pneg %p146
      $region30: #{inception_forward.1} parent=11 // pred_check_branch
        %264 = sbr.rel (%p262) target = $region32
      $region31: #{inception_forward.1} parent=11 // pred_region
        _
      $region32: #{inception_forward.1} parent=11 // pred_fallthru
        _
      // Predicated region
      $region33: #{inception_forward.1} parent=11 // pred_check
        %p265 = pneg %p167
      $region34: #{inception_forward.1} parent=11 // pred_check_branch
        %267 = sbr.rel (%p265) target = $region36
      $region35: #{inception_forward.1} parent=11 // pred_region
        _
      $region36: #{inception_forward.1} parent=11 // pred_fallthru
        _
      // Predicated region
      $region37: #{inception_forward.1} parent=11 // pred_check
        %p268 = pneg %p188
      $region38: #{inception_forward.1} parent=11 // pred_check_branch
        %270 = sbr.rel (%p268) target = $region40
      $region39: #{inception_forward.1} parent=11 // pred_region
        _
      $region40: #{inception_forward.1} parent=11 // pred_fallthru
        _
      // Predicated region
      $region41: #{inception_forward.1} parent=11 // pred_check
        %p271 = pneg %p209
      $region42: #{inception_forward.1} parent=11 // pred_check_branch
        %273 = sbr.rel (%p271) target = $region44
      $region43: #{inception_forward.1} parent=11 // pred_region
        _
      $region44: #{inception_forward.1} parent=11 // pred_fallthru
        _
    $region12: #{inception_forward.1} parent=5 // pred_fallthru
      _
    %p274 = scmp.lt.s32.totalorder %s15, 2
    // Predicated region
    $region45: #{inception_forward.1} parent=5 // pred_check
      %p275 = pneg %p274
    $region46: #{inception_forward.1} parent=5 // pred_check_branch
      %277 = sbr.rel (%p275) target = $region48
    $region47: #{inception_forward.1} parent=5 // pred_region
      // Predicated region
      $region49: #{inception_forward.1} parent=47 // pred_check
        %p278 = pneg %p35
      $region50: #{inception_forward.1} parent=47 // pred_check_branch
        %280 = sbr.rel (%p278) target = $region52
      $region51: #{inception_forward.1} parent=47 // pred_region
        %p281 = scmp.lt.s32.totalorder %s15, 1
        %s282 = scalar_select %p281, %s15, 1
        %s283 = smul.addr %s282, 2
        %s284 = smul.addr %s283, 4
        %s285 = scalar_lea.vmem %s0, %s284
      $region52: #{inception_forward.1} parent=47 // pred_fallthru
        _
    $region48: #{inception_forward.1} parent=5 // pred_fallthru
      _
    %p286 = scmp.le.s32.totalorder 1, %s15
    %p287 = scmp.lt.s32.totalorder %s15, 3
    %p288 = pnand %p286, %p287
    %p289 = pneg %p288
    // Predicated region
    $region53: #{inception_forward.1} parent=5 // pred_check
      _
    $region54: #{inception_forward.1} parent=5 // pred_check_branch
      %291 = sbr.rel (%p288) target = $region56
    $region55: #{inception_forward.1} parent=5 // pred_region
      %s292 = ssub.s32 %s15, 1
      %p293 = scmp.lt.s32.totalorder %s20, 1
      %s294 = scalar_select %p293, %s20, 1
      %s295 = smul.addr %s294, 2
      %s296 = smul.addr %s295, 4
      %s297 = scalar_lea.vmem %s0, %s296
      %p298 = pneg %p41
      %p299 = pneg %p38
      %p300 = pneg %p62
      %p301 = pneg %p59
      %p302 = pneg %p83
      %p303 = pneg %p80
      %p304 = pneg %p104
      %p305 = pneg %p101
      %p306 = pneg %p125
      %p307 = pneg %p122
      %p308 = pneg %p146
      %p309 = pneg %p143
      %p310 = pneg %p167
      %p311 = pneg %p164
      %p312 = pneg %p188
      %p313 = pneg %p185
      %p314 = pneg %p209
      %p315 = pneg %p206
      %p316 = pneg %p235
      %p317 = pneg %p232
      %p318 = scmp.lt.s32.totalorder %s20, 1
      %s319 = scalar_select %p318, %s20, 1
      %s320 = smul.addr %s319, 8
      %s321 = smul.addr %s320, 8
      %s322 = scalar_lea.vmem %s9, %s321
      %p323 = scmp.lt.s32.totalorder %s20, 1
      %s324 = scalar_select %p323, %s20, 1
      %s325 = smul.addr %s324, 2
      %s326 = smul.addr %s325, 4
      %s327 = scalar_lea.vmem %s0, %s326
      %p328 = scmp.lt.s32.totalorder %s20, 1
      %s329 = scalar_select %p328, %s20, 1
      %s330 = smul.addr %s329, 8
      %s331 = smul.addr %s330, 8
      %s332 = scalar_lea.vmem %s9, %s331
      %v333 = vlaneseq
      %v334 = vand.u32 %v333, 127
      %v335 = vadd.s32 %v334, 128
      %v336 = vand.u32 %v334, 15
      %v337 = vand.u32 %v335, 15
      %vm338 = vcmp.ge.s32.totalorder %v334, 16
      %vm339 = vcmp.ge.s32.totalorder %v335, 16
      %vm340 = vcmp.lt.s32.totalorder %v334, 256
      %vm341 = vcmp.lt.s32.totalorder %v335, 256
      %vm342 = vmand %vm338, %vm340
      %vm343 = vmand %vm339, %vm341
      %vm344 = vcmp.ge.s32.totalorder %v336, 2
      %vm345 = vcmp.ge.s32.totalorder %v337, 2
      %vm346 = vmand %vm342, %vm344
      %vm347 = vmand %vm343, %vm345
      %vm348 = vcmp.lt.s32.totalorder %v336, 16
      %vm349 = vcmp.lt.s32.totalorder %v337, 16
      %vm350 = vmand %vm346, %vm348
      %vm351 = vmand %vm347, %vm349
      %v352 = vsel %vm350, 1, 0
      %v353 = vsel %vm351, 1, 0
      %v354 = vcvt.s32.f32 %v352
      %v355 = vcvt.s32.f32 %v353
      %vm356 = vcmp.ge.s32.totalorder %v336, 1
      %vm357 = vcmp.ge.s32.totalorder %v337, 1
      %vm358 = vmand %vm342, %vm356
      %vm359 = vmand %vm343, %vm357
      %vm360 = vmand %vm358, %vm348
      %vm361 = vmand %vm359, %vm349
      %v362 = vsel %vm360, 1, 0
      %v363 = vsel %vm361, 1, 0
      %v364 = vcvt.s32.f32 %v362
      %v365 = vcvt.s32.f32 %v363
      %vm366 = vcmp.ge.s32.totalorder %v336, 0
      %vm367 = vcmp.ge.s32.totalorder %v337, 0
      %vm368 = vmand %vm342, %vm366
      %vm369 = vmand %vm343, %vm367
      %vm370 = vmand %vm368, %vm348
      %vm371 = vmand %vm369, %vm349
      %v372 = vsel %vm370, 1, 0
      %v373 = vsel %vm371, 1, 0
      %v374 = vcvt.s32.f32 %v372
      %v375 = vcvt.s32.f32 %v373
      %vm376 = vcmp.lt.s32.totalorder %v336, 15
      %vm377 = vcmp.lt.s32.totalorder %v337, 15
      %vm378 = vmand %vm368, %vm376
      %vm379 = vmand %vm369, %vm377
      %v380 = vsel %vm378, 1, 0
      %v381 = vsel %vm379, 1, 0
      %v382 = vcvt.s32.f32 %v380
      %v383 = vcvt.s32.f32 %v381
      %vm384 = vcmp.lt.s32.totalorder %v336, 14
      %vm385 = vcmp.lt.s32.totalorder %v337, 14
      %vm386 = vmand %vm368, %vm384
      %vm387 = vmand %vm369, %vm385
      %v388 = vsel %vm386, 1, 0
      %v389 = vsel %vm387, 1, 0
      %v390 = vcvt.s32.f32 %v388
      %v391 = vcvt.s32.f32 %v389
      %vm392 = vcmp.ge.s32.totalorder %v334, 0
      %vm393 = vcmp.ge.s32.totalorder %v335, 0
      %vm394 = vmand %vm392, %vm340
      %vm395 = vmand %vm393, %vm341
      %vm396 = vmand %vm394, %vm344
      %vm397 = vmand %vm395, %vm345
      %vm398 = vmand %vm396, %vm348
      %vm399 = vmand %vm397, %vm349
      %v400 = vsel %vm398, 1, 0
      %v401 = vsel %vm399, 1, 0
      %v402 = vcvt.s32.f32 %v400
      %v403 = vcvt.s32.f32 %v401
      %vm404 = vmand %vm394, %vm356
      %vm405 = vmand %vm395, %vm357
      %vm406 = vmand %vm404, %vm348
      %vm407 = vmand %vm405, %vm349
      %v408 = vsel %vm406, 1, 0
      %v409 = vsel %vm407, 1, 0
      %v410 = vcvt.s32.f32 %v408
      %v411 = vcvt.s32.f32 %v409
      %vm412 = vmand %vm394, %vm366
      %vm413 = vmand %vm395, %vm367
      %vm414 = vmand %vm412, %vm376
      %vm415 = vmand %vm413, %vm377
      %v416 = vsel %vm414, 1, 0
      %v417 = vsel %vm415, 1, 0
      %v418 = vcvt.s32.f32 %v416
      %v419 = vcvt.s32.f32 %v417
      %vm420 = vmand %vm412, %vm384
      %vm421 = vmand %vm413, %vm385
      %v422 = vsel %vm420, 1, 0
      %v423 = vsel %vm421, 1, 0
      %v424 = vcvt.s32.f32 %v422
      %v425 = vcvt.s32.f32 %v423
      %vm426 = vcmp.lt.s32.totalorder %v334, 240
      %vm427 = vcmp.lt.s32.totalorder %v335, 240
      %vm428 = vmand %vm392, %vm426
      %vm429 = vmand %vm393, %vm427
      %vm430 = vmand %vm428, %vm344
      %vm431 = vmand %vm429, %vm345
      %vm432 = vmand %vm430, %vm348
      %vm433 = vmand %vm431, %vm349
      %v434 = vsel %vm432, 1, 0
      %v435 = vsel %vm433, 1, 0
      %v436 = vcvt.s32.f32 %v434
      %v437 = vcvt.s32.f32 %v435
      %vm438 = vmand %vm428, %vm356
      %vm439 = vmand %vm429, %vm357
      %vm440 = vmand %vm438, %vm348
      %vm441 = vmand %vm439, %vm349
      %v442 = vsel %vm440, 1, 0
      %v443 = vsel %vm441, 1, 0
      %v444 = vcvt.s32.f32 %v442
      %v445 = vcvt.s32.f32 %v443
      %vm446 = vmand %vm428, %vm366
      %vm447 = vmand %vm429, %vm367
      %vm448 = vmand %vm446, %vm348
      %vm449 = vmand %vm447, %vm349
      %v450 = vsel %vm448, 1, 0
      %v451 = vsel %vm449, 1, 0
      %v452 = vcvt.s32.f32 %v450
      %v453 = vcvt.s32.f32 %v451
      %vm454 = vmand %vm446, %vm376
      %vm455 = vmand %vm447, %vm377
      %v456 = vsel %vm454, 1, 0
      %v457 = vsel %vm455, 1, 0
      %v458 = vcvt.s32.f32 %v456
      %v459 = vcvt.s32.f32 %v457
      %vm460 = vmand %vm446, %vm384
      %vm461 = vmand %vm447, %vm385
      %v462 = vsel %vm460, 1, 0
      %v463 = vsel %vm461, 1, 0
      %v464 = vcvt.s32.f32 %v462
      %v465 = vcvt.s32.f32 %v463
      %v466 = vld [vmem:[%s327] sm:$0xff]
      %v467 = vld [vmem:[%s1] sm:$0xff]
      %v468 = vld [vmem:[%s1 + $0x8] sm:$0xff]
      %v469 = vld [vmem:[%s1 + $0x10] sm:$0xff]
      %v470 = vld [vmem:[%s2] sm:$0xff]
      %v471 = vld [vmem:[%s2 + $0x8] sm:$0xff]
      %v472 = vld [vmem:[%s2 + $0x10] sm:$0xff]
      %474 = vset.pattern.permute.xlu0 0
      %475 = vperm.xlu0 %474, %v470
      %v476 = vpop.permute.xlu0 %475
      %479 = vset.pattern.permute.xlu0 0
      %480 = vperm.xlu0 %479, %v471
      %v481 = vpop.permute.xlu0 %480
      %484 = vset.pattern.permute.xlu0 0
      %485 = vperm.xlu0 %484, %v472
      %v486 = vpop.permute.xlu0 %485
      %v489 = vcombine.high %v466, %v466
      %vm490 = vcmask 31744
      %v492 = vsel %vm490, %v467, 0
      %v495 = vsel %vm490, %v468, 0
      %v498 = vsel %vm490, %v469, 0
      %vm500 = vcmask 1043456
      %v501 = vsel %vm500, %v466, 0
      %v503 = vsel %vm500, %v489, 0
      %505 = vmatprep.subr.mxu0 %v503
      %506 = vmatpush1.msra.mxu0 %v501
      %507 = vmatprep.subr.mxu0 0.0
      %508 = vmatpush1.msra.mxu0 0.0
      %509 = vmatprep.subr.mxu0 0.0
      %510 = vmatpush1.msra.mxu0 0.0
      %511 = vmatprep.subr.mxu0 0.0
      %512 = vmatpush1.msra.mxu0 0.0
      %513 = vmatprep.subr.mxu0 0.0
      %514 = vmatpush1.msra.mxu0 0.0
      %515 = vmatprep.subr.mxu0 0.0
      %516 = vmatpush1.msra.mxu0 0.0
      %517 = vmatprep.subr.mxu0 0.0
      %518 = vmatpush1.msra.mxu0 0.0
      %519 = vmatprep.subr.mxu0 0.0
      %520 = vmatpush1.msra.mxu0 0.0
      %521 = vmatprep.subr.mxu0 0.0
      %522 = vmatpush1.msra.mxu0 0.0
      %523 = vmatprep.subr.mxu0 0.0
      %524 = vmatpush1.msra.mxu0 0.0
      %525 = vmatprep.subr.mxu0 0.0
      %526 = vmatpush1.msra.mxu0 0.0
      %527 = vmatprep.subr.mxu0 0.0
      %528 = vmatpush1.msra.mxu0 0.0
      %529 = vmatprep.subr.mxu0 0.0
      %530 = vmatpush1.msra.mxu0 0.0
      %531 = vmatprep.subr.mxu0 0.0
      %532 = vmatpush1.msra.mxu0 0.0
      %533 = vmatprep.subr.mxu0 0.0
      %534 = vmatpush1.msra.mxu0 0.0
      %535 = vmatprep.subr.mxu0 0.0
      %536 = vmatpush1.msra.mxu0 0.0
      %537 = vmatprep.subr.mxu0 0.0
      %538 = vmatpush1.msra.mxu0 0.0
      %539 = vmatprep.subr.mxu0 0.0
      %540 = vmatpush1.msra.mxu0 0.0
      %541 = vmatprep.subr.mxu0 0.0
      %542 = vmatpush1.msra.mxu0 0.0
      %543 = vmatprep.subr.mxu0 0.0
      %544 = vmatpush1.msra.mxu0 0.0
      %545 = vmatprep.subr.mxu0 0.0
      %546 = vmatpush1.msra.mxu0 0.0
      %547 = vmatprep.subr.mxu0 0.0
      %548 = vmatpush1.msra.mxu0 0.0
      %549 = vmatprep.subr.mxu0 0.0
      %550 = vmatpush1.msra.mxu0 0.0
      %551 = vmatprep.subr.mxu0 0.0
      %552 = vmatpush1.msra.mxu0 0.0
      %553 = vmatprep.subr.mxu0 0.0
      %554 = vmatpush1.msra.mxu0 0.0
      %555 = vmatprep.subr.mxu0 0.0
      %556 = vmatpush1.msra.mxu0 0.0
      %557 = vmatprep.subr.mxu0 0.0
      %558 = vmatpush1.msra.mxu0 0.0
      %559 = vmatprep.subr.mxu0 0.0
      %560 = vmatpush1.msra.mxu0 0.0
      %561 = vmatprep.subr.mxu0 0.0
      %562 = vmatpush1.msra.mxu0 0.0
      %563 = vmatprep.subr.mxu0 0.0
      %564 = vmatpush1.msra.mxu0 0.0
      %565 = vmatprep.subr.mxu0 0.0
      %566 = vmatpush1.msra.mxu0 0.0
      %567 = vmatprep.subr.mxu0 0.0
      %568 = vmatpush1.msra.mxu0 0.0
      %569 = vmatprep.mubr.f32.mxu0 0.0
      %570 = vmatmul.mubr.f32.gmra.mrb[0].mxu0 %v492
      %v571 = vpop.f32.mrb[0].mxu0
      %v572 = vadd.f32 %v476, %v571
      %v573 = vpop.f32.mrb[0].mxu0
      %v574 = vadd.f32 %v476, %v573
      %575 = vmatprep.mubr.f32.mxu0 0.0
      %576 = vmatmul.mubr.f32.gmra.mrb[0].mxu0 %v495
      %v577 = vpop.f32.mrb[0].mxu0
      %v578 = vadd.f32 %v481, %v577
      %v579 = vpop.f32.mrb[0].mxu0
      %v580 = vadd.f32 %v481, %v579
      %581 = vmatprep.mubr.f32.mxu0 0.0
      %582 = vmatmul.mubr.f32.gmra.mrb[0].mxu0 %v498
      %v583 = vpop.f32.mrb[0].mxu0
      %v584 = vadd.f32 %v486, %v583
      %v585 = vpop.f32.mrb[0].mxu0
      %v586 = vadd.f32 %v486, %v585
      %587 = vdwg.mxu0
      %vm588 = vcmp.gt.f32.partialorder %v572, 0.0
      %vm589 = vcmp.gt.f32.partialorder %v574, 0.0
      %vm590 = vcmp.gt.f32.partialorder %v578, 0.0
      %vm591 = vcmp.gt.f32.partialorder %v580, 0.0
      %vm592 = vcmp.gt.f32.partialorder %v584, 0.0
      %vm593 = vcmp.gt.f32.partialorder %v586, 0.0
      %v594 = vmul.f32 %v572, 0.05
      %v595 = vmul.f32 %v574, 0.05
      %v596 = vmul.f32 %v578, 0.05
      %v597 = vmul.f32 %v580, 0.05
      %v598 = vmul.f32 %v584, 0.05
      %v599 = vmul.f32 %v586, 0.05
      %v600 = vsel %vm588, %v572, %v594
      %v601 = vsel %vm589, %v574, %v595
      %v602 = vsel %vm590, %v578, %v596
      %v603 = vsel %vm591, %v580, %v597
      %v604 = vsel %vm592, %v584, %v598
      %v605 = vsel %vm593, %v586, %v599
      %606 = vrot.lane.b32.xlu0 %v600, 17
      %v607 = vpop.permute.xlu0 %606
      %608 = vrot.lane.b32.xlu0 %v601, 17
      %v609 = vpop.permute.xlu0 %608
      %vm610 = vcmp.lt.s32.totalorder %v334, 17
      %v611 = vsel %vm610, %v607, %v609
      %v612 = vsel %vm610, %v609, %v607
      %v613 = vmul.f32 %v612, %v364
      %v614 = vmul.f32 %v611, %v365
      %615 = vrot.lane.b32.xlu0 %v600, 16
      %v616 = vpop.permute.xlu0 %615
      %617 = vrot.lane.b32.xlu0 %v601, 16
      %v618 = vpop.permute.xlu0 %617
      %vm619 = vcmp.lt.s32.totalorder %v334, 16
      %v620 = vsel %vm619, %v616, %v618
      %v621 = vsel %vm619, %v618, %v616
      %v622 = vmul.f32 %v621, %v374
      %v623 = vmul.f32 %v620, %v375
      %624 = vrot.lane.b32.xlu0 %v600, 15
      %v625 = vpop.permute.xlu0 %624
      %626 = vrot.lane.b32.xlu0 %v601, 15
      %v627 = vpop.permute.xlu0 %626
      %vm628 = vcmp.lt.s32.totalorder %v334, 15
      %v629 = vsel %vm628, %v625, %v627
      %v630 = vsel %vm628, %v627, %v625
      %v631 = vmul.f32 %v630, %v382
      %v632 = vmul.f32 %v629, %v383
      %633 = vrot.lane.b32.xlu0 %v600, 1
      %v634 = vpop.permute.xlu0 %633
      %635 = vrot.lane.b32.xlu0 %v601, 1
      %v636 = vpop.permute.xlu0 %635
      %vm637 = vcmp.lt.s32.totalorder %v334, 1
      %v638 = vsel %vm637, %v634, %v636
      %v639 = vsel %vm637, %v636, %v634
      %v640 = vmul.f32 %v639, %v410
      %v641 = vmul.f32 %v638, %v411
      %642 = vrot.lane.b32.xlu0 %v600, 127
      %v643 = vpop.permute.xlu0 %642
      %644 = vrot.lane.b32.xlu0 %v601, 127
      %v645 = vpop.permute.xlu0 %644
      %vm646 = vcmp.lt.s32.totalorder %v334, 127
      %v647 = vsel %vm646, %v643, %v645
      %v648 = vsel %vm646, %v645, %v643
      %v649 = vmul.f32 %v647, %v418
      %v650 = vmul.f32 %v648, %v419
      %651 = vrot.lane.b32.xlu0 %v600, 113
      %v652 = vpop.permute.xlu0 %651
      %653 = vrot.lane.b32.xlu0 %v601, 113
      %v654 = vpop.permute.xlu0 %653
      %vm655 = vcmp.lt.s32.totalorder %v334, 113
      %v656 = vsel %vm655, %v652, %v654
      %v657 = vsel %vm655, %v654, %v652
      %v658 = vmul.f32 %v656, %v444
      %v659 = vmul.f32 %v657, %v445
      %660 = vrot.lane.b32.xlu0 %v600, 112
      %v661 = vpop.permute.xlu0 %660
      %662 = vrot.lane.b32.xlu0 %v601, 112
      %v663 = vpop.permute.xlu0 %662
      %vm664 = vcmp.lt.s32.totalorder %v334, 112
      %v665 = vsel %vm664, %v661, %v663
      %v666 = vsel %vm664, %v663, %v661
      %v667 = vmul.f32 %v665, %v452
      %v668 = vmul.f32 %v666, %v453
      %669 = vrot.lane.b32.xlu0 %v600, 111
      %v670 = vpop.permute.xlu0 %669
      %671 = vrot.lane.b32.xlu0 %v601, 111
      %v672 = vpop.permute.xlu0 %671
      %vm673 = vcmp.lt.s32.totalorder %v334, 111
      %v674 = vsel %vm673, %v670, %v672
      %v675 = vsel %vm673, %v672, %v670
      %v676 = vmul.f32 %v674, %v458
      %v677 = vmul.f32 %v675, %v459
      %v678 = vld [vmem:[%s3] sm:$0xff]
      %v679 = vld [vmem:[%s4] sm:$0xff]
      %681 = vset.pattern.permute.xlu0 0
      %682 = vperm.xlu0 %681, %v679
      %v683 = vpop.permute.xlu0 %682
      %vm685 = vcmask 588800
      %v687 = vsel %vm685, %v678, 0
      %689 = vmatprep.subr.mxu0 %v614
      %690 = vmatpush1.msra.mxu0 %v613
      %691 = vmatprep.subr.mxu0 %v623
      %692 = vmatpush1.msra.mxu0 %v622
      %693 = vmatprep.subr.mxu0 %v632
      %694 = vmatpush1.msra.mxu0 %v631
      %695 = vmatprep.subr.mxu0 %v641
      %696 = vmatpush1.msra.mxu0 %v640
      %697 = vmatprep.subr.mxu0 %v601
      %698 = vmatpush1.msra.mxu0 %v600
      %699 = vmatprep.subr.mxu0 %v650
      %700 = vmatpush1.msra.mxu0 %v649
      %701 = vmatprep.subr.mxu0 %v659
      %702 = vmatpush1.msra.mxu0 %v658
      %703 = vmatprep.subr.mxu0 %v668
      %704 = vmatpush1.msra.mxu0 %v667
      %705 = vmatprep.subr.mxu0 %v677
      %706 = vmatpush1.msra.mxu0 %v676
      %707 = vmatprep.subr.mxu0 0.0
      %708 = vmatpush1.msra.mxu0 0.0
      %709 = vmatprep.subr.mxu0 0.0
      %710 = vmatpush1.msra.mxu0 0.0
      %711 = vmatprep.subr.mxu0 0.0
      %712 = vmatpush1.msra.mxu0 0.0
      %713 = vmatprep.subr.mxu0 0.0
      %714 = vmatpush1.msra.mxu0 0.0
      %715 = vmatprep.subr.mxu0 0.0
      %716 = vmatpush1.msra.mxu0 0.0
      %717 = vmatprep.subr.mxu0 0.0
      %718 = vmatpush1.msra.mxu0 0.0
      %719 = vmatprep.subr.mxu0 0.0
      %720 = vmatpush1.msra.mxu0 0.0
      %721 = vmatprep.subr.mxu0 0.0
      %722 = vmatpush1.msra.mxu0 0.0
      %723 = vmatprep.subr.mxu0 0.0
      %724 = vmatpush1.msra.mxu0 0.0
      %725 = vmatprep.subr.mxu0 0.0
      %726 = vmatpush1.msra.mxu0 0.0
      %727 = vmatprep.subr.mxu0 0.0
      %728 = vmatpush1.msra.mxu0 0.0
      %729 = vmatprep.subr.mxu0 0.0
      %730 = vmatpush1.msra.mxu0 0.0
      %731 = vmatprep.subr.mxu0 0.0
      %732 = vmatpush1.msra.mxu0 0.0
      %733 = vmatprep.subr.mxu0 0.0
      %734 = vmatpush1.msra.mxu0 0.0
      %735 = vmatprep.subr.mxu0 0.0
      %736 = vmatpush1.msra.mxu0 0.0
      %737 = vmatprep.subr.mxu0 0.0
      %738 = vmatpush1.msra.mxu0 0.0
      %739 = vmatprep.subr.mxu0 0.0
      %740 = vmatpush1.msra.mxu0 0.0
      %741 = vmatprep.subr.mxu0 0.0
      %742 = vmatpush1.msra.mxu0 0.0
      %743 = vmatprep.subr.mxu0 0.0
      %744 = vmatpush1.msra.mxu0 0.0
      %745 = vmatprep.subr.mxu0 0.0
      %746 = vmatpush1.msra.mxu0 0.0
      %747 = vmatprep.subr.mxu0 0.0
      %748 = vmatpush1.msra.mxu0 0.0
      %749 = vmatprep.subr.mxu0 0.0
      %750 = vmatpush1.msra.mxu0 0.0
      %751 = vmatprep.subr.mxu0 0.0
      %752 = vmatpush1.msra.mxu0 0.0
      %753 = vmatprep.mubr.f32.mxu0 0.0
      %754 = vmatmul.mubr.f32.gmra.mrb[0].mxu0 %v687
      %v755 = vpop.f32.mrb[0].mxu0
      %v756 = vadd.f32 %v683, %v755
      %v757 = vpop.f32.mrb[0].mxu0
      %v758 = vadd.f32 %v683, %v757
      %759 = vdwg.mxu0
      %vm760 = vcmp.gt.f32.partialorder %v756, 0.0
      %vm761 = vcmp.gt.f32.partialorder %v758, 0.0
      %v762 = vmul.f32 %v756, 0.05
      %v763 = vmul.f32 %v758, 0.05
      %v764 = vsel %vm760, %v756, %v762
      %v765 = vsel %vm761, %v758, %v763
      %766 = vrot.lane.b32.xlu0 %v602, 18
      %v767 = vpop.permute.xlu0 %766
      %768 = vrot.lane.b32.xlu0 %v603, 18
      %v769 = vpop.permute.xlu0 %768
      %vm770 = vcmp.lt.s32.totalorder %v334, 18
      %v771 = vsel %vm770, %v767, %v769
      %v772 = vsel %vm770, %v769, %v767
      %v773 = vmul.f32 %v772, %v354
      %v774 = vmul.f32 %v771, %v355
      %775 = vrot.lane.b32.xlu0 %v602, 17
      %v776 = vpop.permute.xlu0 %775
      %777 = vrot.lane.b32.xlu0 %v603, 17
      %v778 = vpop.permute.xlu0 %777
      %v779 = vsel %vm610, %v776, %v778
      %v780 = vsel %vm610, %v778, %v776
      %v781 = vmul.f32 %v780, %v364
      %v782 = vmul.f32 %v779, %v365
      %783 = vrot.lane.b32.xlu0 %v602, 16
      %v784 = vpop.permute.xlu0 %783
      %785 = vrot.lane.b32.xlu0 %v603, 16
      %v786 = vpop.permute.xlu0 %785
      %v787 = vsel %vm619, %v784, %v786
      %v788 = vsel %vm619, %v786, %v784
      %v789 = vmul.f32 %v788, %v374
      %v790 = vmul.f32 %v787, %v375
      %791 = vrot.lane.b32.xlu0 %v602, 15
      %v792 = vpop.permute.xlu0 %791
      %793 = vrot.lane.b32.xlu0 %v603, 15
      %v794 = vpop.permute.xlu0 %793
      %v795 = vsel %vm628, %v792, %v794
      %v796 = vsel %vm628, %v794, %v792
      %v797 = vmul.f32 %v796, %v382
      %v798 = vmul.f32 %v795, %v383
      %799 = vrot.lane.b32.xlu0 %v602, 14
      %v800 = vpop.permute.xlu0 %799
      %801 = vrot.lane.b32.xlu0 %v603, 14
      %v802 = vpop.permute.xlu0 %801
      %vm803 = vcmp.lt.s32.totalorder %v334, 14
      %v804 = vsel %vm803, %v800, %v802
      %v805 = vsel %vm803, %v802, %v800
      %v806 = vmul.f32 %v805, %v390
      %v807 = vmul.f32 %v804, %v391
      %808 = vrot.lane.b32.xlu0 %v602, 2
      %v809 = vpop.permute.xlu0 %808
      %810 = vrot.lane.b32.xlu0 %v603, 2
      %v811 = vpop.permute.xlu0 %810
      %vm812 = vcmp.lt.s32.totalorder %v334, 2
      %v813 = vsel %vm812, %v809, %v811
      %v814 = vsel %vm812, %v811, %v809
      %v815 = vmul.f32 %v814, %v402
      %v816 = vmul.f32 %v813, %v403
      %817 = vrot.lane.b32.xlu0 %v602, 1
      %v818 = vpop.permute.xlu0 %817
      %819 = vrot.lane.b32.xlu0 %v603, 1
      %v820 = vpop.permute.xlu0 %819
      %v821 = vsel %vm637, %v818, %v820
      %v822 = vsel %vm637, %v820, %v818
      %v823 = vmul.f32 %v822, %v410
      %v824 = vmul.f32 %v821, %v411
      %825 = vrot.lane.b32.xlu0 %v602, 127
      %v826 = vpop.permute.xlu0 %825
      %827 = vrot.lane.b32.xlu0 %v603, 127
      %v828 = vpop.permute.xlu0 %827
      %v829 = vsel %vm646, %v826, %v828
      %v830 = vsel %vm646, %v828, %v826
      %v831 = vmul.f32 %v829, %v418
      %v832 = vmul.f32 %v830, %v419
      %833 = vrot.lane.b32.xlu0 %v602, 126
      %v834 = vpop.permute.xlu0 %833
      %835 = vrot.lane.b32.xlu0 %v603, 126
      %v836 = vpop.permute.xlu0 %835
      %vm837 = vcmp.lt.s32.totalorder %v334, 126
      %v838 = vsel %vm837, %v834, %v836
      %v839 = vsel %vm837, %v836, %v834
      %v840 = vmul.f32 %v838, %v424
      %v841 = vmul.f32 %v839, %v425
      %842 = vrot.lane.b32.xlu0 %v602, 114
      %v843 = vpop.permute.xlu0 %842
      %844 = vrot.lane.b32.xlu0 %v603, 114
      %v845 = vpop.permute.xlu0 %844
      %vm846 = vcmp.lt.s32.totalorder %v334, 114
      %v847 = vsel %vm846, %v843, %v845
      %v848 = vsel %vm846, %v845, %v843
      %v849 = vmul.f32 %v847, %v436
      %v850 = vmul.f32 %v848, %v437
      %851 = vrot.lane.b32.xlu0 %v602, 113
      %v852 = vpop.permute.xlu0 %851
      %853 = vrot.lane.b32.xlu0 %v603, 113
      %v854 = vpop.permute.xlu0 %853
      %v855 = vsel %vm655, %v852, %v854
      %v856 = vsel %vm655, %v854, %v852
      %v857 = vmul.f32 %v855, %v444
      %v858 = vmul.f32 %v856, %v445
      %859 = vrot.lane.b32.xlu0 %v602, 112
      %v860 = vpop.permute.xlu0 %859
      %861 = vrot.lane.b32.xlu0 %v603, 112
      %v862 = vpop.permute.xlu0 %861
      %v863 = vsel %vm664, %v860, %v862
      %v864 = vsel %vm664, %v862, %v860
      %v865 = vmul.f32 %v863, %v452
      %v866 = vmul.f32 %v864, %v453
      %867 = vrot.lane.b32.xlu0 %v602, 111
      %v868 = vpop.permute.xlu0 %867
      %869 = vrot.lane.b32.xlu0 %v603, 111
      %v870 = vpop.permute.xlu0 %869
      %v871 = vsel %vm673, %v868, %v870
      %v872 = vsel %vm673, %v870, %v868
      %v873 = vmul.f32 %v871, %v458
      %v874 = vmul.f32 %v872, %v459
      %875 = vrot.lane.b32.xlu0 %v602, 110
      %v876 = vpop.permute.xlu0 %875
      %877 = vrot.lane.b32.xlu0 %v603, 110
      %v878 = vpop.permute.xlu0 %877
      %vm879 = vcmp.lt.s32.totalorder %v334, 110
      %v880 = vsel %vm879, %v876, %v878
      %v881 = vsel %vm879, %v878, %v876
      %v882 = vmul.f32 %v880, %v464
      %v883 = vmul.f32 %v881, %v465
      %v884 = vld [vmem:[%s5] sm:$0xff]
      %v885 = vld [vmem:[%s6] sm:$0xff]
      %887 = vset.pattern.permute.xlu0 0
      %888 = vperm.xlu0 %887, %v885
      %v889 = vpop.permute.xlu0 %888
      %vm891 = vcmask 982016
      %v893 = vsel %vm891, %v884, 0
      %895 = vmatprep.subr.mxu0 %v774
      %896 = vmatpush1.msra.mxu0 %v773
      %897 = vmatprep.subr.mxu0 %v782
      %898 = vmatpush1.msra.mxu0 %v781
      %899 = vmatprep.subr.mxu0 %v790
      %900 = vmatpush1.msra.mxu0 %v789
      %901 = vmatprep.subr.mxu0 %v798
      %902 = vmatpush1.msra.mxu0 %v797
      %903 = vmatprep.subr.mxu0 %v807
      %904 = vmatpush1.msra.mxu0 %v806
      %905 = vmatprep.subr.mxu0 %v816
      %906 = vmatpush1.msra.mxu0 %v815
      %907 = vmatprep.subr.mxu0 %v824
      %908 = vmatpush1.msra.mxu0 %v823
      %909 = vmatprep.subr.mxu0 %v603
      %910 = vmatpush1.msra.mxu0 %v602
      %911 = vmatprep.subr.mxu0 %v832
      %912 = vmatpush1.msra.mxu0 %v831
      %913 = vmatprep.subr.mxu0 %v841
      %914 = vmatpush1.msra.mxu0 %v840
      %915 = vmatprep.subr.mxu0 %v850
      %916 = vmatpush1.msra.mxu0 %v849
      %917 = vmatprep.subr.mxu0 %v858
      %918 = vmatpush1.msra.mxu0 %v857
      %919 = vmatprep.subr.mxu0 %v866
      %920 = vmatpush1.msra.mxu0 %v865
      %921 = vmatprep.subr.mxu0 %v874
      %922 = vmatpush1.msra.mxu0 %v873
      %923 = vmatprep.subr.mxu0 %v883
      %924 = vmatpush1.msra.mxu0 %v882
      %925 = vmatprep.subr.mxu0 0.0
      %926 = vmatpush1.msra.mxu0 0.0
      %927 = vmatprep.subr.mxu0 0.0
      %928 = vmatpush1.msra.mxu0 0.0
      %929 = vmatprep.subr.mxu0 0.0
      %930 = vmatpush1.msra.mxu0 0.0
      %931 = vmatprep.subr.mxu0 0.0
      %932 = vmatpush1.msra.mxu0 0.0
      %933 = vmatprep.subr.mxu0 0.0
      %934 = vmatpush1.msra.mxu0 0.0
      %935 = vmatprep.subr.mxu0 0.0
      %936 = vmatpush1.msra.mxu0 0.0
      %937 = vmatprep.subr.mxu0 0.0
      %938 = vmatpush1.msra.mxu0 0.0
      %939 = vmatprep.subr.mxu0 0.0
      %940 = vmatpush1.msra.mxu0 0.0
      %941 = vmatprep.subr.mxu0 0.0
      %942 = vmatpush1.msra.mxu0 0.0
      %943 = vmatprep.subr.mxu0 0.0
      %944 = vmatpush1.msra.mxu0 0.0
      %945 = vmatprep.subr.mxu0 0.0
      %946 = vmatpush1.msra.mxu0 0.0
      %947 = vmatprep.subr.mxu0 0.0
      %948 = vmatpush1.msra.mxu0 0.0
      %949 = vmatprep.subr.mxu0 0.0
      %950 = vmatpush1.msra.mxu0 0.0
      %951 = vmatprep.subr.mxu0 0.0
      %952 = vmatpush1.msra.mxu0 0.0
      %953 = vmatprep.subr.mxu0 0.0
      %954 = vmatpush1.msra.mxu0 0.0
      %955 = vmatprep.subr.mxu0 0.0
      %956 = vmatpush1.msra.mxu0 0.0
      %957 = vmatprep.subr.mxu0 0.0
      %958 = vmatpush1.msra.mxu0 0.0
      %959 = vmatprep.mubr.f32.mxu0 0.0
      %960 = vmatmul.mubr.f32.gmra.mrb[0].mxu0 %v893
      %v961 = vpop.f32.mrb[0].mxu0
      %v962 = vadd.f32 %v889, %v961
      %v963 = vpop.f32.mrb[0].mxu0
      %v964 = vadd.f32 %v889, %v963
      %965 = vdwg.mxu0
      %vm966 = vcmp.gt.f32.partialorder %v962, 0.0
      %vm967 = vcmp.gt.f32.partialorder %v964, 0.0
      %v968 = vmul.f32 %v962, 0.05
      %v969 = vmul.f32 %v964, 0.05
      %v970 = vsel %vm966, %v962, %v968
      %v971 = vsel %vm967, %v964, %v969
      %973 = vrot.lane.b32.xlu0 %v466, 17
      %v974 = vpop.permute.xlu0 %973
      %975 = vrot.lane.b32.xlu0 %v489, 17
      %v976 = vpop.permute.xlu0 %975
      %v977 = vsel %vm610, %v974, %v976
      %v978 = vsel %vm610, %v976, %v974
      %v979 = vmul.f32 %v978, %v364
      %v980 = vmul.f32 %v977, %v365
      %v981 = vsub.f32 %v364, 1.0
      %v982 = vsub.f32 %v365, 1.0
      %v983 = vmul.f32 %v981, 3e+38
      %v984 = vmul.f32 %v982, 3e+38
      %v985 = vadd.f32 %v979, %v983
      %v986 = vadd.f32 %v980, %v984
      %v989 = vcombine.low %v985, %v986
      %v991 = vmax.f32 %v466, %v989
      %992 = vrot.lane.b32.xlu0 %v466, 16
      %v993 = vpop.permute.xlu0 %992
      %994 = vrot.lane.b32.xlu0 %v489, 16
      %v995 = vpop.permute.xlu0 %994
      %v996 = vsel %vm619, %v993, %v995
      %v997 = vsel %vm619, %v995, %v993
      %v998 = vmul.f32 %v997, %v374
      %v999 = vmul.f32 %v996, %v375
      %v1000 = vsub.f32 %v374, 1.0
      %v1001 = vsub.f32 %v375, 1.0
      %v1002 = vmul.f32 %v1000, 3e+38
      %v1003 = vmul.f32 %v1001, 3e+38
      %v1004 = vadd.f32 %v998, %v1002
      %v1005 = vadd.f32 %v999, %v1003
      %v1008 = vcombine.low %v1004, %v1005
      %v1010 = vmax.f32 %v991, %v1008
      %1011 = vrot.lane.b32.xlu0 %v466, 15
      %v1012 = vpop.permute.xlu0 %1011
      %1013 = vrot.lane.b32.xlu0 %v489, 15
      %v1014 = vpop.permute.xlu0 %1013
      %v1015 = vsel %vm628, %v1012, %v1014
      %v1016 = vsel %vm628, %v1014, %v1012
      %v1017 = vmul.f32 %v1016, %v382
      %v1018 = vmul.f32 %v1015, %v383
      %v1019 = vsub.f32 %v382, 1.0
      %v1020 = vsub.f32 %v383, 1.0
      %v1021 = vmul.f32 %v1019, 3e+38
      %v1022 = vmul.f32 %v1020, 3e+38
      %v1023 = vadd.f32 %v1017, %v1021
      %v1024 = vadd.f32 %v1018, %v1022
      %v1027 = vcombine.low %v1023, %v1024
      %v1029 = vmax.f32 %v1010, %v1027
      %1030 = vrot.lane.b32.xlu0 %v466, 1
      %v1031 = vpop.permute.xlu0 %1030
      %1032 = vrot.lane.b32.xlu0 %v489, 1
      %v1033 = vpop.permute.xlu0 %1032
      %v1034 = vsel %vm637, %v1031, %v1033
      %v1035 = vsel %vm637, %v1033, %v1031
      %v1036 = vmul.f32 %v1035, %v410
      %v1037 = vmul.f32 %v1034, %v411
      %v1038 = vsub.f32 %v410, 1.0
      %v1039 = vsub.f32 %v411, 1.0
      %v1040 = vmul.f32 %v1038, 3e+38
      %v1041 = vmul.f32 %v1039, 3e+38
      %v1042 = vadd.f32 %v1036, %v1040
      %v1043 = vadd.f32 %v1037, %v1041
      %v1046 = vcombine.low %v1042, %v1043
      %v1048 = vmax.f32 %v1029, %v1046
      %1049 = vrot.lane.b32.xlu0 %v466, 127
      %v1050 = vpop.permute.xlu0 %1049
      %1051 = vrot.lane.b32.xlu0 %v489, 127
      %v1052 = vpop.permute.xlu0 %1051
      %v1053 = vsel %vm646, %v1050, %v1052
      %v1054 = vsel %vm646, %v1052, %v1050
      %v1055 = vmul.f32 %v1053, %v418
      %v1056 = vmul.f32 %v1054, %v419
      %v1057 = vsub.f32 %v418, 1.0
      %v1058 = vsub.f32 %v419, 1.0
      %v1059 = vmul.f32 %v1057, 3e+38
      %v1060 = vmul.f32 %v1058, 3e+38
      %v1061 = vadd.f32 %v1055, %v1059
      %v1062 = vadd.f32 %v1056, %v1060
      %v1065 = vcombine.low %v1061, %v1062
      %v1067 = vmax.f32 %v1048, %v1065
      %1068 = vrot.lane.b32.xlu0 %v466, 113
      %v1069 = vpop.permute.xlu0 %1068
      %1070 = vrot.lane.b32.xlu0 %v489, 113
      %v1071 = vpop.permute.xlu0 %1070
      %v1072 = vsel %vm655, %v1069, %v1071
      %v1073 = vsel %vm655, %v1071, %v1069
      %v1074 = vmul.f32 %v1072, %v444
      %v1075 = vmul.f32 %v1073, %v445
      %v1076 = vsub.f32 %v444, 1.0
      %v1077 = vsub.f32 %v445, 1.0
      %v1078 = vmul.f32 %v1076, 3e+38
      %v1079 = vmul.f32 %v1077, 3e+38
      %v1080 = vadd.f32 %v1074, %v1078
      %v1081 = vadd.f32 %v1075, %v1079
      %v1084 = vcombine.low %v1080, %v1081
      %v1086 = vmax.f32 %v1067, %v1084
      %1087 = vrot.lane.b32.xlu0 %v466, 112
      %v1088 = vpop.permute.xlu0 %1087
      %1089 = vrot.lane.b32.xlu0 %v489, 112
      %v1090 = vpop.permute.xlu0 %1089
      %v1091 = vsel %vm664, %v1088, %v1090
      %v1092 = vsel %vm664, %v1090, %v1088
      %v1093 = vmul.f32 %v1091, %v452
      %v1094 = vmul.f32 %v1092, %v453
      %v1095 = vsub.f32 %v452, 1.0
      %v1096 = vsub.f32 %v453, 1.0
      %v1097 = vmul.f32 %v1095, 3e+38
      %v1098 = vmul.f32 %v1096, 3e+38
      %v1099 = vadd.f32 %v1093, %v1097
      %v1100 = vadd.f32 %v1094, %v1098
      %v1103 = vcombine.low %v1099, %v1100
      %v1105 = vmax.f32 %v1086, %v1103
      %1106 = vrot.lane.b32.xlu0 %v466, 111
      %v1107 = vpop.permute.xlu0 %1106
      %1108 = vrot.lane.b32.xlu0 %v489, 111
      %v1109 = vpop.permute.xlu0 %1108
      %v1110 = vsel %vm673, %v1107, %v1109
      %v1111 = vsel %vm673, %v1109, %v1107
      %v1112 = vmul.f32 %v1110, %v458
      %v1113 = vmul.f32 %v1111, %v459
      %v1114 = vsub.f32 %v458, 1.0
      %v1115 = vsub.f32 %v459, 1.0
      %v1116 = vmul.f32 %v1114, 3e+38
      %v1117 = vmul.f32 %v1115, 3e+38
      %v1118 = vadd.f32 %v1112, %v1116
      %v1119 = vadd.f32 %v1113, %v1117
      %v1122 = vcombine.low %v1118, %v1119
      %v1124 = vmax.f32 %v1105, %v1122
      %v1125 = vld [vmem:[%s7] sm:$0xff]
      %v1126 = vld [vmem:[%s8] sm:$0xff]
      %1128 = vset.pattern.permute.xlu0 0
      %1129 = vperm.xlu0 %1128, %v1126
      %v1130 = vpop.permute.xlu0 %1129
      %v1133 = vcombine.high %v1124, %v1124
      %v1135 = vsel %vm490, %v1125, 0
      %v1137 = vsel %vm500, %v1124, 0
      %v1139 = vsel %vm500, %v1133, 0
      %1141 = vmatprep.subr.mxu0 %v1139
      %1142 = vmatpush1.msra.mxu0 %v1137
      %1143 = vmatprep.subr.mxu0 0.0
      %1144 = vmatpush1.msra.mxu0 0.0
      %1145 = vmatprep.subr.mxu0 0.0
      %1146 = vmatpush1.msra.mxu0 0.0
      %1147 = vmatprep.subr.mxu0 0.0
      %1148 = vmatpush1.msra.mxu0 0.0
      %1149 = vmatprep.subr.mxu0 0.0
      %1150 = vmatpush1.msra.mxu0 0.0
      %1151 = vmatprep.subr.mxu0 0.0
      %1152 = vmatpush1.msra.mxu0 0.0
      %1153 = vmatprep.subr.mxu0 0.0
      %1154 = vmatpush1.msra.mxu0 0.0
      %1155 = vmatprep.subr.mxu0 0.0
      %1156 = vmatpush1.msra.mxu0 0.0
      %1157 = vmatprep.subr.mxu0 0.0
      %1158 = vmatpush1.msra.mxu0 0.0
      %1159 = vmatprep.subr.mxu0 0.0
      %1160 = vmatpush1.msra.mxu0 0.0
      %1161 = vmatprep.subr.mxu0 0.0
      %1162 = vmatpush1.msra.mxu0 0.0
      %1163 = vmatprep.subr.mxu0 0.0
      %1164 = vmatpush1.msra.mxu0 0.0
      %1165 = vmatprep.subr.mxu0 0.0
      %1166 = vmatpush1.msra.mxu0 0.0
      %1167 = vmatprep.subr.mxu0 0.0
      %1168 = vmatpush1.msra.mxu0 0.0
      %1169 = vmatprep.subr.mxu0 0.0
      %1170 = vmatpush1.msra.mxu0 0.0
      %1171 = vmatprep.subr.mxu0 0.0
      %1172 = vmatpush1.msra.mxu0 0.0
      %1173 = vmatprep.subr.mxu0 0.0
      %1174 = vmatpush1.msra.mxu0 0.0
      %1175 = vmatprep.subr.mxu0 0.0
      %1176 = vmatpush1.msra.mxu0 0.0
      %1177 = vmatprep.subr.mxu0 0.0
      %1178 = vmatpush1.msra.mxu0 0.0
      %1179 = vmatprep.subr.mxu0 0.0
      %1180 = vmatpush1.msra.mxu0 0.0
      %1181 = vmatprep.subr.mxu0 0.0
      %1182 = vmatpush1.msra.mxu0 0.0
      %1183 = vmatprep.subr.mxu0 0.0
      %1184 = vmatpush1.msra.mxu0 0.0
      %1185 = vmatprep.subr.mxu0 0.0
      %1186 = vmatpush1.msra.mxu0 0.0
      %1187 = vmatprep.subr.mxu0 0.0
      %1188 = vmatpush1.msra.mxu0 0.0
      %1189 = vmatprep.subr.mxu0 0.0
      %1190 = vmatpush1.msra.mxu0 0.0
      %1191 = vmatprep.subr.mxu0 0.0
      %1192 = vmatpush1.msra.mxu0 0.0
      %1193 = vmatprep.subr.mxu0 0.0
      %1194 = vmatpush1.msra.mxu0 0.0
      %1195 = vmatprep.subr.mxu0 0.0
      %1196 = vmatpush1.msra.mxu0 0.0
      %1197 = vmatprep.subr.mxu0 0.0
      %1198 = vmatpush1.msra.mxu0 0.0
      %1199 = vmatprep.subr.mxu0 0.0
      %1200 = vmatpush1.msra.mxu0 0.0
      %1201 = vmatprep.subr.mxu0 0.0
      %1202 = vmatpush1.msra.mxu0 0.0
      %1203 = vmatprep.subr.mxu0 0.0
      %1204 = vmatpush1.msra.mxu0 0.0
      %1205 = vmatprep.mubr.f32.mxu0 0.0
      %1206 = vmatmul.mubr.f32.gmra.mrb[0].mxu0 %v1135
      %v1207 = vpop.f32.mrb[0].mxu0
      %v1208 = vadd.f32 %v1130, %v1207
      %v1209 = vpop.f32.mrb[0].mxu0
      %v1210 = vadd.f32 %v1130, %v1209
      %1211 = vdwg.mxu0
      %vm1212 = vcmp.gt.f32.partialorder %v1208, 0.0
      %vm1213 = vcmp.gt.f32.partialorder %v1210, 0.0
      %v1214 = vmul.f32 %v1208, 0.05
      %v1215 = vmul.f32 %v1210, 0.05
      %v1216 = vsel %vm1212, %v1208, %v1214
      %v1217 = vsel %vm1213, %v1210, %v1215
      %1218 = vst [vmem:[%s332] sm:$0xff] %v604
      %1219 = vst [vmem:[%s332 + $0x8] sm:$0xff] %v605
      %1220 = vst [vmem:[%s332 + $0x10] sm:$0xff] %v764
      %1221 = vst [vmem:[%s332 + $0x18] sm:$0xff] %v765
      %1222 = vst [vmem:[%s332 + $0x20] sm:$0xff] %v970
      %1223 = vst [vmem:[%s332 + $0x28] sm:$0xff] %v971
      %1224 = vst [vmem:[%s332 + $0x30] sm:$0xff] %v1216
      %1225 = vst [vmem:[%s332 + $0x38] sm:$0xff] %v1217
      %p1226 = scmp.lt.s32.totalorder %s20, 1
      %s1227 = scalar_select %p1226, %s20, 1
      %s1228 = smul.addr %s1227, 8
      %s1229 = smul.addr %s1228, 8
      %s1230 = scalar_lea.vmem %s9, %s1229
      // Predicated region
      $region57: #{inception_forward.1} parent=55 // pred_check
        %p1231 = pneg %p232
      $region58: #{inception_forward.1} parent=55 // pred_check_branch
        %1233 = sbr.rel (%p1231) target = $region60
      $region59: #{inception_forward.1} parent=55 // pred_region
        _
      $region60: #{inception_forward.1} parent=55 // pred_fallthru
        _
    $region56: #{inception_forward.1} parent=5 // pred_fallthru
      _
    %p1234 = scmp.le.s32.totalorder 2, %s15
    // Predicated region
    $region61: #{inception_forward.1} parent=5 // pred_check
      %p1235 = pneg %p1234
    $region62: #{inception_forward.1} parent=5 // pred_check_branch
      %1237 = sbr.rel (%p1235) target = $region64
    $region63: #{inception_forward.1} parent=5 // pred_region
      %s1238 = ssub.s32 %s15, 2
      // Predicated region
      $region65: #{inception_forward.1} parent=63 // pred_check
        %p1239 = pneg %p238
      $region66: #{inception_forward.1} parent=63 // pred_check_branch
        %1241 = sbr.rel (%p1239) target = $region68
      $region67: #{inception_forward.1} parent=63 // pred_region
        %p1242 = scmp.lt.s32.totalorder %s21, 1
        %s1243 = scalar_select %p1242, %s21, 1
        %s1244 = smul.addr %s1243, 8
        %s1245 = smul.addr %s1244, 8
        %s1246 = scalar_lea.vmem %s9, %s1245
      $region68: #{inception_forward.1} parent=63 // pred_fallthru
        _
    $region64: #{inception_forward.1} parent=5 // pred_fallthru
      _
  $region6: #{inception_forward.1} parent=0 // loop_footer
    %s19 = sadd.s32 1, %s15
  $region7: #{inception_forward.1} parent=0 // loop_footer_branch
    %14 = sbr.rel target = $region3
  $region8: #{inception_forward.1} parent=0 // loop_exit
    _

</llo_original>
